<compile_context>
chip_gen: v5e
topology: v5e:2x2
jax: 0.10.0
libtpu: 0.0.40
codegen_flags: <defaults>
</compile_context>

<pallas_src>
import functools
import math

import jax
import jax.numpy as jnp
from jax.experimental import pallas as pl
from jax.experimental.pallas import tpu as pltpu

_LANE = 128
_SUBLANE = 8


def _round_up(x, m):
    return (x + m - 1) // m * m


def _cdiv(a, b):
    return -(-a // b)


# ---------------------------------------------------------------------------
# Kernel
# ---------------------------------------------------------------------------
def _make_kernel(n_blocks, n_actions, fc, compute_dtype):
    """Builds the fused forward kernel for a static block count / width."""
    inv_actions = 1.0 / float(n_actions)
    if compute_dtype == jnp.float32:
        cast = lambda a: a                      # no redundant astype on the f32 path
    else:
        cast = lambda a: a.astype(compute_dtype)

    def kernel(x_ref, *refs):
        out_ref = refs[-1]
        b_ref = refs[-2]                        # packed bias slab (n_rows, >=2*fc), f32
        w_it = iter(refs[:-2])
        row = [0]                               # static bias-row cursor (trace time)

        def linear(h, w_ref):
            width = w_ref.shape[1]              # bias slice width == weight out dim
            b = b_ref[row[0]:row[0] + 1, :width]
            row[0] += 1
            # f32 accumulation on the MXU regardless of operand dtype
            return jnp.dot(cast(h), w_ref[...],
                           preferred_element_type=jnp.float32) + b

        # shared input layer
        h = jnp.maximum(linear(x_ref[...], next(w_it)), 0.0)

        # residual SE blocks (unrolled at trace time)
        for _ in range(n_blocks):
            t = linear(h, next(w_it))                    # fused Linear(fc,fc) o Linear(fc,fc)
            s = jnp.maximum(linear(t, next(w_it)), 0.0)  # SE squeeze (sq padded to 128)
            e = linear(s, next(w_it))                    # SE excite: one (sq, 2*fc) matmul
            w_gate = e[:, :fc]                           # static 128-aligned lane slices
            b_gate = e[:, fc:]
            gate = 1.0 / (1.0 + jnp.exp(-w_gate))        # sigmoid (EUP exp + reciprocal)
            h = jnp.maximum(h * gate + b_gate + h, 0.0)

        # shared output layer
        h = jnp.maximum(linear(h, next(w_it)), 0.0)

        # dueling heads: lane-dense (tm, 128) advantage slab + XLU row-reduce v head
        advs = linear(h, next(w_it))                     # (tm, a_pad); padded cols exactly 0
        mean = jnp.sum(advs, axis=-1, keepdims=True) * inv_actions
        wv_row = b_ref[row[0]:row[0] + 1, :fc]
        row[0] += 1
        bv = b_ref[row[0]:row[0] + 1, 0:1]
        v = jnp.sum(h * wv_row, axis=-1, keepdims=True) + bv
        out_ref[...] = (advs - mean + v).astype(out_ref.dtype)

    return kernel


# ---------------------------------------------------------------------------
# One-time parameter preprocessing (outside the per-step jitted forward)
# ---------------------------------------------------------------------------
def prepare_params(params, n_actions, compute_dtype=jnp.bfloat16):
    """Fuse / pad / pack / cast parameters once.  Returns (weights_tuple, bias_slab)."""
    (w_in, b_in), block_params, (w_out, b_out), (wa, ba), (wv, bv) = params
    D, fc = w_in.shape
    D_pad = _round_up(D, _LANE)
    a_pad = _round_up(max(n_actions, _LANE), _LANE)
    bias_w = max(2 * fc, a_pad)

    hi = jax.lax.Precision.HIGHEST
    wcast = (lambda w: w) if compute_dtype == jnp.float32 \
        else (lambda w: w.astype(compute_dtype))

    def pad_to(a, rows, cols):
        return jnp.pad(a, ((0, rows - a.shape[0]), (0, cols - a.shape[1])))

    def bias_row(b):
        return pad_to(b.reshape(1, -1).astype(jnp.float32), 1, bias_w)

    weights = [wcast(pad_to(w_in, D_pad, fc))]
    bias_rows = [bias_row(b_in)]

    for (wb1, bb1, wb2, bb2, ws1, bs1, ws2, bs2) in block_params:
        # fuse the two back-to-back Linear(fc,fc) layers (no nonlinearity between them)
        wb = jnp.dot(wb1, wb2, precision=hi)
        bb = jnp.dot(bb1, wb2, precision=hi) + bb2
        sq = ws1.shape[1]
        sq_pad = _round_up(sq, _LANE)
        weights += [wcast(wb),
                    wcast(pad_to(ws1, fc, sq_pad)),       # zero cols -> relu(0)=0, exact
                    wcast(pad_to(ws2, sq_pad, 2 * fc))]   # zero rows -> no contribution
        bias_rows += [bias_row(bb), bias_row(bs1), bias_row(bs2)]

    weights += [wcast(w_out)]
    bias_rows += [bias_row(b_out)]

    # advantage head zero-padded to 128 output lanes (row mean stays exact)
    weights += [wcast(pad_to(wa, fc, a_pad))]
    bias_rows += [bias_row(ba),
                  bias_row(wv.reshape(1, fc)),            # v head as a row for an XLU reduce
                  bias_row(bv.reshape(1, 1))]

    bias_slab = jnp.concatenate(bias_rows, axis=0)
    return tuple(weights), bias_slab


# ---------------------------------------------------------------------------
# Forward wrapper
# ---------------------------------------------------------------------------
def _vmem_limit_bytes():
    cap = 64 << 20
    try:
        cap = int(pltpu.get_tpu_info().vmem_capacity_bytes)
    except Exception:
        pass
    if cap <= (64 << 20):                         # v7x-class parts: stay conservative
        return max(32 << 20, cap // 2)
    return int(min(3 * cap // 4, 96 << 20))       # v5e / v6e: 128 MiB physical VMEM


def _resident_spec(arr, single_buffer):
    idx = lambda i: (0,) * arr.ndim               # constant index_map -> VMEM resident
    if single_buffer:
        try:
            return pl.BlockSpec(arr.shape, idx, pipeline_mode=pl.Buffered(1))
        except (AttributeError, TypeError):
            pass
    return pl.BlockSpec(arr.shape, idx)


def state_action_forward(observations, prepared, *, n_actions, tile_rows=256,
                         single_buffer_weights=True):
    """observations: (B, shape0, shape1) f32; prepared = prepare_params(...).
    Returns qsa: (B, n_actions) float32."""
    weights, bias_slab = prepared
    B = observations.shape[0]
    D = observations.shape[1] * observations.shape[2]
    x = observations.reshape(B, D)                # nn.Flatten

    D_pad, fc = weights[0].shape
    a_pad = weights[-1].shape[1]
    n_blocks = (len(weights) - 3) // 3
    compute_dtype = weights[0].dtype

    if D_pad != D:                                # lane-dense activation DMA
        x = jnp.pad(x, ((0, 0), (0, D_pad - D)))

    # Tile count first (>= 2 tiles when B >= 16 so v7x megacore gets both cores),
    # then the smallest 8-aligned tile that covers B -> minimal zero-row padding.
    if B >= 2 * _SUBLANE:
        n_tiles = max(2, _cdiv(B, tile_rows))
    else:
        n_tiles = 1
    tm = _round_up(_cdiv(B, n_tiles), _SUBLANE)
    B_pad = tm * n_tiles
    if B_pad != B:
        x = jnp.pad(x, ((0, B_pad - B), (0, 0)))

    # advisory cost estimate so XLA can schedule/overlap this call
    flops = 2 * B_pad * (sum(w.shape[0] * w.shape[1] for w in weights) + fc)
    transcendentals = B_pad * n_blocks * fc       # sigmoids
    param_bytes = sum(int(p.size) * p.dtype.itemsize for p in weights)
    param_bytes += int(bias_slab.size) * bias_slab.dtype.itemsize
    bytes_accessed = int(B_pad * D_pad * 4 + param_bytes + B_pad * a_pad * 4)

    kernel = _make_kernel(n_blocks, n_actions, fc, compute_dtype)

    qsa_pad = pl.pallas_call(
        kernel,
        out_shape=jax.ShapeDtypeStruct((B_pad, a_pad), jnp.float32),
        grid=(n_tiles,),
        in_specs=[pl.BlockSpec((tm, D_pad), lambda i: (i, 0))]
                 + [_resident_spec(w, single_buffer_weights) for w in weights]
                 + [_resident_spec(bias_slab, single_buffer_weights)],
        out_specs=pl.BlockSpec((tm, a_pad), lambda i: (i, 0)),
        compiler_params=pltpu.CompilerParams(
            dimension_semantics=("parallel",),     # megacore sharding of the batch grid
            vmem_limit_bytes=_vmem_limit_bytes()),
        cost_estimate=pl.CostEstimate(flops=int(flops),
                                      transcendentals=int(transcendentals),
                                      bytes_accessed=int(bytes_accessed)),
    )(x, *weights, bias_slab)

    return qsa_pad[:B, :n_actions]


# ---------------------------------------------------------------------------
# Init + pure-JAX reference (module-faithful, unfused parameters)
# ---------------------------------------------------------------------------
def init_params(key, in_dim, fc_dims, n_actions, blocks=3):
    """nn.Linear-style init (uniform +/- 1/sqrt(fan_in)); weights stored (in, out)."""
    def linear(k, fan_in, fan_out):
        kw, kb = jax.random.split(k)
        bound = 1.0 / math.sqrt(fan_in)
        w = jax.random.uniform(kw, (fan_in, fan_out), jnp.float32, -bound, bound)
        b = jax.random.uniform(kb, (1, fan_out), jnp.float32, -bound, bound)
        return w, b

    sq = fc_dims // 4
    keys = iter(jax.random.split(key, 4 + 4 * blocks))

    shared_in = linear(next(keys), in_dim, fc_dims)
    block_params = []
    for _ in range(blocks):
        wb1, bb1 = linear(next(keys), fc_dims, fc_dims)
        wb2, bb2 = linear(next(keys), fc_dims, fc_dims)
        ws1, bs1 = linear(next(keys), fc_dims, sq)
        ws2, bs2 = linear(next(keys), sq, 2 * fc_dims)
        block_params.append((wb1, bb1, wb2, bb2, ws1, bs1, ws2, bs2))
    shared_out = linear(next(keys), fc_dims, fc_dims)
    advs_head = linear(next(keys), fc_dims, n_actions)
    v_head = linear(next(keys), fc_dims, 1)
    return (shared_in, tuple(block_params), shared_out, advs_head, v_head)


def reference_forward(observations, params):
    """Pure-JAX reference matching the PyTorch module semantics."""
    (w_in, b_in), block_params, (w_out, b_out), (wa, ba), (wv, bv) = params
    fc = w_in.shape[1]
    with jax.default_matmul_precision("highest"):
        x = observations.reshape(observations.shape[0], -1)
        h = jnp.maximum(x @ w_in + b_in, 0.0)
        for (wb1, bb1, wb2, bb2, ws1, bs1, ws2, bs2) in block_params:
            t = (h @ wb1 + bb1) @ wb2 + bb2
            s = jnp.maximum(t @ ws1 + bs1, 0.0)
            e = s @ ws2 + bs2
            w_gate, b_gate = e[:, :fc], e[:, fc:]
            h = jnp.maximum(h * jax.nn.sigmoid(w_gate) + b_gate + h, 0.0)
        h = jnp.maximum(h @ w_out + b_out, 0.0)
        advs = h @ wa + ba
        advs = advs - advs.mean(axis=-1, keepdims=True)
        v = h @ wv + bv
        return v + advs


# ---------------------------------------------------------------------------
# Demo
# ---------------------------------------------------------------------------
if __name__ == "__main__":
    # Small, module-consistent config: shape=(4, 16) -> D=64, fc_dims=128,
    # blocks=3, n_actions=10, batch=8.
    shape = (4, 16)
    n_actions = 10
    fc_dims = 128
    blocks = 3
    batch = 8

    key = jax.random.PRNGKey(0)
    k_obs, k_params = jax.random.split(key)
    observations = jax.random.normal(k_obs, (batch, shape[0], shape[1]),
                                     dtype=jnp.float32)
    params = init_params(k_params, shape[0] * shape[1], fc_dims, n_actions,
                         blocks=blocks)

    def run(prepared):
        # Prefer single-buffered resident weights; fall back to default buffering
        # if the installed Pallas version rejects pipeline_mode=Buffered(1).
        last_err = None
        for single_buffer in (True, False):
            fwd = jax.jit(functools.partial(
                state_action_forward, n_actions=n_actions,
                single_buffer_weights=single_buffer))
            try:
                return jax.block_until_ready(fwd(observations, prepared))
            except Exception as e:          # noqa: BLE001 - retry without Buffered(1)
                last_err = e
                if not single_buffer:
                    raise
        raise last_err

    ref = reference_forward(observations, params)

    # exact-dtype path (f32 operands) for a tight correctness check
    qsa_f32 = run(prepare_params(params, n_actions, compute_dtype=jnp.float32))
    assert qsa_f32.shape == (batch, n_actions)
    err32 = float(jnp.max(jnp.abs(qsa_f32 - ref)))
    assert jnp.allclose(qsa_f32, ref, atol=2e-3, rtol=2e-3), \
        f"f32 max abs err {err32}"

    # production default: bf16 operands / f32 accumulation (bf16-native MXU)
    qsa_bf16 = run(prepare_params(params, n_actions))       # compute_dtype=bfloat16
    assert qsa_bf16.shape == (batch, n_actions)
    assert bool(jnp.all(jnp.isfinite(qsa_bf16)))
    errbf = float(jnp.max(jnp.abs(qsa_bf16 - ref)))
    assert jnp.allclose(qsa_bf16, ref, atol=2e-1, rtol=2e-1), \
        f"bf16 max abs err {errbf}"

    print("KERNEL_OK")
</pallas_src>

<mosaic_0001>
module attributes {stable_mosaic.version = 11 : i64} {
  func.func @kernel(%arg0: i32, %arg1: memref<8x128xf32, #tpu.memory_space<vmem>>, %arg2: memref<128x128xf32, #tpu.memory_space<vmem>>, %arg3: memref<128x128xf32, #tpu.memory_space<vmem>>, %arg4: memref<128x128xf32, #tpu.memory_space<vmem>>, %arg5: memref<128x256xf32, #tpu.memory_space<vmem>>, %arg6: memref<128x128xf32, #tpu.memory_space<vmem>>, %arg7: memref<128x128xf32, #tpu.memory_space<vmem>>, %arg8: memref<128x256xf32, #tpu.memory_space<vmem>>, %arg9: memref<128x128xf32, #tpu.memory_space<vmem>>, %arg10: memref<128x128xf32, #tpu.memory_space<vmem>>, %arg11: memref<128x256xf32, #tpu.memory_space<vmem>>, %arg12: memref<128x128xf32, #tpu.memory_space<vmem>>, %arg13: memref<128x128xf32, #tpu.memory_space<vmem>>, %arg14: memref<14x256xf32, #tpu.memory_space<vmem>>, %arg15: memref<8x128xf32, #tpu.memory_space<vmem>>) attributes {dimension_semantics = [#tpu.dimension_semantics<parallel>], iteration_bounds = array<i64: 1>, scalar_prefetch = 0 : i64, scratch_operands = 0 : i64, tpu.core_type = #tpu.core_type<tc>, window_params = [{transform_indices = @transform_0, window_bounds = array<i64: 8, 128>}, {pipeline_mode = #tpu.pipeline_mode<synchronous>, transform_indices = @transform_1, window_bounds = array<i64: 128, 128>}, {pipeline_mode = #tpu.pipeline_mode<synchronous>, transform_indices = @transform_2, window_bounds = array<i64: 128, 128>}, {pipeline_mode = #tpu.pipeline_mode<synchronous>, transform_indices = @transform_3, window_bounds = array<i64: 128, 128>}, {pipeline_mode = #tpu.pipeline_mode<synchronous>, transform_indices = @transform_4, window_bounds = array<i64: 128, 256>}, {pipeline_mode = #tpu.pipeline_mode<synchronous>, transform_indices = @transform_5, window_bounds = array<i64: 128, 128>}, {pipeline_mode = #tpu.pipeline_mode<synchronous>, transform_indices = @transform_6, window_bounds = array<i64: 128, 128>}, {pipeline_mode = #tpu.pipeline_mode<synchronous>, transform_indices = @transform_7, window_bounds = array<i64: 128, 256>}, {pipeline_mode = #tpu.pipeline_mode<synchronous>, transform_indices = @transform_8, window_bounds = array<i64: 128, 128>}, {pipeline_mode = #tpu.pipeline_mode<synchronous>, transform_indices = @transform_9, window_bounds = array<i64: 128, 128>}, {pipeline_mode = #tpu.pipeline_mode<synchronous>, transform_indices = @transform_10, window_bounds = array<i64: 128, 256>}, {pipeline_mode = #tpu.pipeline_mode<synchronous>, transform_indices = @transform_11, window_bounds = array<i64: 128, 128>}, {pipeline_mode = #tpu.pipeline_mode<synchronous>, transform_indices = @transform_12, window_bounds = array<i64: 128, 128>}, {pipeline_mode = #tpu.pipeline_mode<synchronous>, transform_indices = @transform_13, window_bounds = array<i64: 14, 256>}, {transform_indices = @transform_14, window_bounds = array<i64: 8, 128>}]} {
    %c0 = arith.constant 0 : index
    %c0_0 = arith.constant 0 : index
    %0 = vector.load %arg1[%c0, %c0_0] : memref<8x128xf32, #tpu.memory_space<vmem>>, vector<8x128xf32>
    %c0_1 = arith.constant 0 : index
    %c0_2 = arith.constant 0 : index
    %1 = vector.load %arg14[%c0_1, %c0_2] : memref<14x256xf32, #tpu.memory_space<vmem>>, vector<1x128xf32>
    %c0_3 = arith.constant 0 : index
    %c0_4 = arith.constant 0 : index
    %2 = vector.load %arg2[%c0_3, %c0_4] : memref<128x128xf32, #tpu.memory_space<vmem>>, vector<128x128xf32>
    %cst = arith.constant dense<0.000000e+00> : vector<8x128xf32>
    %3 = tpu.matmul %0, %2, %cst {dimension_numbers = #tpu.dot_dimension_numbers<[1], [0], [0], [1], [0, 0, 1, 1], [], []>} : vector<8x128xf32>, vector<128x128xf32>, vector<8x128xf32> -> vector<8x128xf32>
    %4 = vector.broadcast %1 : vector<1x128xf32> to vector<8x128xf32>
    %5 = arith.addf %3, %4 : vector<8x128xf32>
    %cst_5 = arith.constant 0.000000e+00 : f32
    %6 = vector.broadcast %cst_5 : f32 to vector<8x128xf32>
    %7 = arith.maximumf %5, %6 : vector<8x128xf32>
    %c1 = arith.constant 1 : index
    %c0_6 = arith.constant 0 : index
    %8 = vector.load %arg14[%c1, %c0_6] : memref<14x256xf32, #tpu.memory_space<vmem>>, vector<1x128xf32>
    %c0_7 = arith.constant 0 : index
    %c0_8 = arith.constant 0 : index
    %9 = vector.load %arg3[%c0_7, %c0_8] : memref<128x128xf32, #tpu.memory_space<vmem>>, vector<128x128xf32>
    %cst_9 = arith.constant dense<0.000000e+00> : vector<8x128xf32>
    %10 = tpu.matmul %7, %9, %cst_9 {dimension_numbers = #tpu.dot_dimension_numbers<[1], [0], [0], [1], [0, 0, 1, 1], [], []>} : vector<8x128xf32>, vector<128x128xf32>, vector<8x128xf32> -> vector<8x128xf32>
    %11 = vector.broadcast %8 : vector<1x128xf32> to vector<8x128xf32>
    %12 = arith.addf %10, %11 : vector<8x128xf32>
    %c2 = arith.constant 2 : index
    %c0_10 = arith.constant 0 : index
    %13 = vector.load %arg14[%c2, %c0_10] : memref<14x256xf32, #tpu.memory_space<vmem>>, vector<1x128xf32>
    %c0_11 = arith.constant 0 : index
    %c0_12 = arith.constant 0 : index
    %14 = vector.load %arg4[%c0_11, %c0_12] : memref<128x128xf32, #tpu.memory_space<vmem>>, vector<128x128xf32>
    %cst_13 = arith.constant dense<0.000000e+00> : vector<8x128xf32>
    %15 = tpu.matmul %12, %14, %cst_13 {dimension_numbers = #tpu.dot_dimension_numbers<[1], [0], [0], [1], [0, 0, 1, 1], [], []>} : vector<8x128xf32>, vector<128x128xf32>, vector<8x128xf32> -> vector<8x128xf32>
    %16 = vector.broadcast %13 : vector<1x128xf32> to vector<8x128xf32>
    %17 = arith.addf %15, %16 : vector<8x128xf32>
    %cst_14 = arith.constant 0.000000e+00 : f32
    %18 = vector.broadcast %cst_14 : f32 to vector<8x128xf32>
    %19 = arith.maximumf %17, %18 : vector<8x128xf32>
    %c3 = arith.constant 3 : index
    %c0_15 = arith.constant 0 : index
    %20 = vector.load %arg14[%c3, %c0_15] : memref<14x256xf32, #tpu.memory_space<vmem>>, vector<1x256xf32>
    %c0_16 = arith.constant 0 : index
    %c0_17 = arith.constant 0 : index
    %21 = vector.load %arg5[%c0_16, %c0_17] : memref<128x256xf32, #tpu.memory_space<vmem>>, vector<128x256xf32>
    %cst_18 = arith.constant dense<0.000000e+00> : vector<8x256xf32>
    %22 = tpu.matmul %19, %21, %cst_18 {dimension_numbers = #tpu.dot_dimension_numbers<[1], [0], [0], [1], [0, 0, 1, 1], [], []>} : vector<8x128xf32>, vector<128x256xf32>, vector<8x256xf32> -> vector<8x256xf32>
    %23 = vector.broadcast %20 : vector<1x256xf32> to vector<8x256xf32>
    %24 = arith.addf %22, %23 : vector<8x256xf32>
    %25 = vector.extract_strided_slice %24 {offsets = [0, 0], sizes = [8, 128], strides = [1, 1]} : vector<8x256xf32> to vector<8x128xf32>
    %26 = vector.extract_strided_slice %24 {offsets = [0, 128], sizes = [8, 128], strides = [1, 1]} : vector<8x256xf32> to vector<8x128xf32>
    %cst_19 = arith.constant 0.000000e+00 : f32
    %27 = vector.broadcast %cst_19 : f32 to vector<8x128xf32>
    %28 = arith.subf %27, %25 : vector<8x128xf32>
    %29 = math.exp %28 : vector<8x128xf32>
    %cst_20 = arith.constant 1.000000e+00 : f32
    %30 = vector.broadcast %cst_20 : f32 to vector<8x128xf32>
    %31 = arith.addf %30, %29 : vector<8x128xf32>
    %cst_21 = arith.constant 1.000000e+00 : f32
    %32 = vector.broadcast %cst_21 : f32 to vector<8x128xf32>
    %33 = arith.divf %32, %31 : vector<8x128xf32>
    %34 = arith.mulf %7, %33 : vector<8x128xf32>
    %35 = arith.addf %34, %26 : vector<8x128xf32>
    %36 = arith.addf %35, %7 : vector<8x128xf32>
    %cst_22 = arith.constant 0.000000e+00 : f32
    %37 = vector.broadcast %cst_22 : f32 to vector<8x128xf32>
    %38 = arith.maximumf %36, %37 : vector<8x128xf32>
    %c4 = arith.constant 4 : index
    %c0_23 = arith.constant 0 : index
    %39 = vector.load %arg14[%c4, %c0_23] : memref<14x256xf32, #tpu.memory_space<vmem>>, vector<1x128xf32>
    %c0_24 = arith.constant 0 : index
    %c0_25 = arith.constant 0 : index
    %40 = vector.load %arg6[%c0_24, %c0_25] : memref<128x128xf32, #tpu.memory_space<vmem>>, vector<128x128xf32>
    %cst_26 = arith.constant dense<0.000000e+00> : vector<8x128xf32>
    %41 = tpu.matmul %38, %40, %cst_26 {dimension_numbers = #tpu.dot_dimension_numbers<[1], [0], [0], [1], [0, 0, 1, 1], [], []>} : vector<8x128xf32>, vector<128x128xf32>, vector<8x128xf32> -> vector<8x128xf32>
    %42 = vector.broadcast %39 : vector<1x128xf32> to vector<8x128xf32>
    %43 = arith.addf %41, %42 : vector<8x128xf32>
    %c5 = arith.constant 5 : index
    %c0_27 = arith.constant 0 : index
    %44 = vector.load %arg14[%c5, %c0_27] : memref<14x256xf32, #tpu.memory_space<vmem>>, vector<1x128xf32>
    %c0_28 = arith.constant 0 : index
    %c0_29 = arith.constant 0 : index
    %45 = vector.load %arg7[%c0_28, %c0_29] : memref<128x128xf32, #tpu.memory_space<vmem>>, vector<128x128xf32>
    %cst_30 = arith.constant dense<0.000000e+00> : vector<8x128xf32>
    %46 = tpu.matmul %43, %45, %cst_30 {dimension_numbers = #tpu.dot_dimension_numbers<[1], [0], [0], [1], [0, 0, 1, 1], [], []>} : vector<8x128xf32>, vector<128x128xf32>, vector<8x128xf32> -> vector<8x128xf32>
    %47 = vector.broadcast %44 : vector<1x128xf32> to vector<8x128xf32>
    %48 = arith.addf %46, %47 : vector<8x128xf32>
    %cst_31 = arith.constant 0.000000e+00 : f32
    %49 = vector.broadcast %cst_31 : f32 to vector<8x128xf32>
    %50 = arith.maximumf %48, %49 : vector<8x128xf32>
    %c6 = arith.constant 6 : index
    %c0_32 = arith.constant 0 : index
    %51 = vector.load %arg14[%c6, %c0_32] : memref<14x256xf32, #tpu.memory_space<vmem>>, vector<1x256xf32>
    %c0_33 = arith.constant 0 : index
    %c0_34 = arith.constant 0 : index
    %52 = vector.load %arg8[%c0_33, %c0_34] : memref<128x256xf32, #tpu.memory_space<vmem>>, vector<128x256xf32>
    %cst_35 = arith.constant dense<0.000000e+00> : vector<8x256xf32>
    %53 = tpu.matmul %50, %52, %cst_35 {dimension_numbers = #tpu.dot_dimension_numbers<[1], [0], [0], [1], [0, 0, 1, 1], [], []>} : vector<8x128xf32>, vector<128x256xf32>, vector<8x256xf32> -> vector<8x256xf32>
    %54 = vector.broadcast %51 : vector<1x256xf32> to vector<8x256xf32>
    %55 = arith.addf %53, %54 : vector<8x256xf32>
    %56 = vector.extract_strided_slice %55 {offsets = [0, 0], sizes = [8, 128], strides = [1, 1]} : vector<8x256xf32> to vector<8x128xf32>
    %57 = vector.extract_strided_slice %55 {offsets = [0, 128], sizes = [8, 128], strides = [1, 1]} : vector<8x256xf32> to vector<8x128xf32>
    %cst_36 = arith.constant 0.000000e+00 : f32
    %58 = vector.broadcast %cst_36 : f32 to vector<8x128xf32>
    %59 = arith.subf %58, %56 : vector<8x128xf32>
    %60 = math.exp %59 : vector<8x128xf32>
    %cst_37 = arith.constant 1.000000e+00 : f32
    %61 = vector.broadcast %cst_37 : f32 to vector<8x128xf32>
    %62 = arith.addf %61, %60 : vector<8x128xf32>
    %cst_38 = arith.constant 1.000000e+00 : f32
    %63 = vector.broadcast %cst_38 : f32 to vector<8x128xf32>
    %64 = arith.divf %63, %62 : vector<8x128xf32>
    %65 = arith.mulf %38, %64 : vector<8x128xf32>
    %66 = arith.addf %65, %57 : vector<8x128xf32>
    %67 = arith.addf %66, %38 : vector<8x128xf32>
    %cst_39 = arith.constant 0.000000e+00 : f32
    %68 = vector.broadcast %cst_39 : f32 to vector<8x128xf32>
    %69 = arith.maximumf %67, %68 : vector<8x128xf32>
    %c7 = arith.constant 7 : index
    %c0_40 = arith.constant 0 : index
    %70 = vector.load %arg14[%c7, %c0_40] : memref<14x256xf32, #tpu.memory_space<vmem>>, vector<1x128xf32>
    %c0_41 = arith.constant 0 : index
    %c0_42 = arith.constant 0 : index
    %71 = vector.load %arg9[%c0_41, %c0_42] : memref<128x128xf32, #tpu.memory_space<vmem>>, vector<128x128xf32>
    %cst_43 = arith.constant dense<0.000000e+00> : vector<8x128xf32>
    %72 = tpu.matmul %69, %71, %cst_43 {dimension_numbers = #tpu.dot_dimension_numbers<[1], [0], [0], [1], [0, 0, 1, 1], [], []>} : vector<8x128xf32>, vector<128x128xf32>, vector<8x128xf32> -> vector<8x128xf32>
    %73 = vector.broadcast %70 : vector<1x128xf32> to vector<8x128xf32>
    %74 = arith.addf %72, %73 : vector<8x128xf32>
    %c8 = arith.constant 8 : index
    %c0_44 = arith.constant 0 : index
    %75 = vector.load %arg14[%c8, %c0_44] : memref<14x256xf32, #tpu.memory_space<vmem>>, vector<1x128xf32>
    %c0_45 = arith.constant 0 : index
    %c0_46 = arith.constant 0 : index
    %76 = vector.load %arg10[%c0_45, %c0_46] : memref<128x128xf32, #tpu.memory_space<vmem>>, vector<128x128xf32>
    %cst_47 = arith.constant dense<0.000000e+00> : vector<8x128xf32>
    %77 = tpu.matmul %74, %76, %cst_47 {dimension_numbers = #tpu.dot_dimension_numbers<[1], [0], [0], [1], [0, 0, 1, 1], [], []>} : vector<8x128xf32>, vector<128x128xf32>, vector<8x128xf32> -> vector<8x128xf32>
    %78 = vector.broadcast %75 : vector<1x128xf32> to vector<8x128xf32>
    %79 = arith.addf %77, %78 : vector<8x128xf32>
    %cst_48 = arith.constant 0.000000e+00 : f32
    %80 = vector.broadcast %cst_48 : f32 to vector<8x128xf32>
    %81 = arith.maximumf %79, %80 : vector<8x128xf32>
    %c9 = arith.constant 9 : index
    %c0_49 = arith.constant 0 : index
    %82 = vector.load %arg14[%c9, %c0_49] : memref<14x256xf32, #tpu.memory_space<vmem>>, vector<1x256xf32>
    %c0_50 = arith.constant 0 : index
    %c0_51 = arith.constant 0 : index
    %83 = vector.load %arg11[%c0_50, %c0_51] : memref<128x256xf32, #tpu.memory_space<vmem>>, vector<128x256xf32>
    %cst_52 = arith.constant dense<0.000000e+00> : vector<8x256xf32>
    %84 = tpu.matmul %81, %83, %cst_52 {dimension_numbers = #tpu.dot_dimension_numbers<[1], [0], [0], [1], [0, 0, 1, 1], [], []>} : vector<8x128xf32>, vector<128x256xf32>, vector<8x256xf32> -> vector<8x256xf32>
    %85 = vector.broadcast %82 : vector<1x256xf32> to vector<8x256xf32>
    %86 = arith.addf %84, %85 : vector<8x256xf32>
    %87 = vector.extract_strided_slice %86 {offsets = [0, 0], sizes = [8, 128], strides = [1, 1]} : vector<8x256xf32> to vector<8x128xf32>
    %88 = vector.extract_strided_slice %86 {offsets = [0, 128], sizes = [8, 128], strides = [1, 1]} : vector<8x256xf32> to vector<8x128xf32>
    %cst_53 = arith.constant 0.000000e+00 : f32
    %89 = vector.broadcast %cst_53 : f32 to vector<8x128xf32>
    %90 = arith.subf %89, %87 : vector<8x128xf32>
    %91 = math.exp %90 : vector<8x128xf32>
    %cst_54 = arith.constant 1.000000e+00 : f32
    %92 = vector.broadcast %cst_54 : f32 to vector<8x128xf32>
    %93 = arith.addf %92, %91 : vector<8x128xf32>
    %cst_55 = arith.constant 1.000000e+00 : f32
    %94 = vector.broadcast %cst_55 : f32 to vector<8x128xf32>
    %95 = arith.divf %94, %93 : vector<8x128xf32>
    %96 = arith.mulf %69, %95 : vector<8x128xf32>
    %97 = arith.addf %96, %88 : vector<8x128xf32>
    %98 = arith.addf %97, %69 : vector<8x128xf32>
    %cst_56 = arith.constant 0.000000e+00 : f32
    %99 = vector.broadcast %cst_56 : f32 to vector<8x128xf32>
    %100 = arith.maximumf %98, %99 : vector<8x128xf32>
    %c10 = arith.constant 10 : index
    %c0_57 = arith.constant 0 : index
    %101 = vector.load %arg14[%c10, %c0_57] : memref<14x256xf32, #tpu.memory_space<vmem>>, vector<1x128xf32>
    %c0_58 = arith.constant 0 : index
    %c0_59 = arith.constant 0 : index
    %102 = vector.load %arg12[%c0_58, %c0_59] : memref<128x128xf32, #tpu.memory_space<vmem>>, vector<128x128xf32>
    %cst_60 = arith.constant dense<0.000000e+00> : vector<8x128xf32>
    %103 = tpu.matmul %100, %102, %cst_60 {dimension_numbers = #tpu.dot_dimension_numbers<[1], [0], [0], [1], [0, 0, 1, 1], [], []>} : vector<8x128xf32>, vector<128x128xf32>, vector<8x128xf32> -> vector<8x128xf32>
    %104 = vector.broadcast %101 : vector<1x128xf32> to vector<8x128xf32>
    %105 = arith.addf %103, %104 : vector<8x128xf32>
    %cst_61 = arith.constant 0.000000e+00 : f32
    %106 = vector.broadcast %cst_61 : f32 to vector<8x128xf32>
    %107 = arith.maximumf %105, %106 : vector<8x128xf32>
    %c11 = arith.constant 11 : index
    %c0_62 = arith.constant 0 : index
    %108 = vector.load %arg14[%c11, %c0_62] : memref<14x256xf32, #tpu.memory_space<vmem>>, vector<1x128xf32>
    %c0_63 = arith.constant 0 : index
    %c0_64 = arith.constant 0 : index
    %109 = vector.load %arg13[%c0_63, %c0_64] : memref<128x128xf32, #tpu.memory_space<vmem>>, vector<128x128xf32>
    %cst_65 = arith.constant dense<0.000000e+00> : vector<8x128xf32>
    %110 = tpu.matmul %107, %109, %cst_65 {dimension_numbers = #tpu.dot_dimension_numbers<[1], [0], [0], [1], [0, 0, 1, 1], [], []>} : vector<8x128xf32>, vector<128x128xf32>, vector<8x128xf32> -> vector<8x128xf32>
    %111 = vector.broadcast %108 : vector<1x128xf32> to vector<8x128xf32>
    %112 = arith.addf %110, %111 : vector<8x128xf32>
    %cst_66 = arith.constant dense<0.000000e+00> : vector<8xf32>
    %113 = vector.multi_reduction <add>, %112, %cst_66 [1] : vector<8x128xf32> to vector<8xf32>
    %114 = vector.shape_cast %113 : vector<8xf32> to vector<8x1xf32>
    %cst_67 = arith.constant 1.000000e-01 : f32
    %115 = vector.broadcast %cst_67 : f32 to vector<8x1xf32>
    %116 = arith.mulf %114, %115 : vector<8x1xf32>
    %c12 = arith.constant 12 : index
    %c0_68 = arith.constant 0 : index
    %117 = vector.load %arg14[%c12, %c0_68] : memref<14x256xf32, #tpu.memory_space<vmem>>, vector<1x128xf32>
    %c13 = arith.constant 13 : index
    %c0_69 = arith.constant 0 : index
    %118 = vector.load %arg14[%c13, %c0_69] : memref<14x256xf32, #tpu.memory_space<vmem>>, vector<1x1xf32>
    %119 = vector.broadcast %117 : vector<1x128xf32> to vector<8x128xf32>
    %120 = arith.mulf %107, %119 : vector<8x128xf32>
    %cst_70 = arith.constant dense<0.000000e+00> : vector<8xf32>
    %121 = vector.multi_reduction <add>, %120, %cst_70 [1] : vector<8x128xf32> to vector<8xf32>
    %122 = vector.shape_cast %121 : vector<8xf32> to vector<8x1xf32>
    %123 = vector.broadcast %118 : vector<1x1xf32> to vector<8x1xf32>
    %124 = arith.addf %122, %123 : vector<8x1xf32>
    %125 = vector.broadcast %116 : vector<8x1xf32> to vector<8x128xf32>
    %126 = arith.subf %112, %125 : vector<8x128xf32>
    %127 = vector.broadcast %124 : vector<8x1xf32> to vector<8x128xf32>
    %128 = arith.addf %126, %127 : vector<8x128xf32>
    %c0_71 = arith.constant 0 : index
    %c0_72 = arith.constant 0 : index
    %129 = vector.load %arg15[%c0_71, %c0_72] : memref<8x128xf32, #tpu.memory_space<vmem>>, vector<8x128xf32>
    tpu.vector_store %arg15[%c0_71, %c0_72], %128 {strides = array<i32>} : memref<8x128xf32, #tpu.memory_space<vmem>>, vector<8x128xf32>,
    return
  }
  func.func @transform_0(%arg0: i32) -> (i32, i32) {
    %c0_i32 = arith.constant 0 : i32
    %c0_i32_0 = arith.constant 0 : i32
    return %arg0, %c0_i32 : i32, i32
  }
  func.func @transform_1(%arg0: i32) -> (i32, i32) {
    %c0_i32 = arith.constant 0 : i32
    %c0_i32_0 = arith.constant 0 : i32
    %c0_i32_1 = arith.constant 0 : i32
    return %c0_i32, %c0_i32_0 : i32, i32
  }
  func.func @transform_2(%arg0: i32) -> (i32, i32) {
    %c0_i32 = arith.constant 0 : i32
    %c0_i32_0 = arith.constant 0 : i32
    %c0_i32_1 = arith.constant 0 : i32
    return %c0_i32, %c0_i32_0 : i32, i32
  }
  func.func @transform_3(%arg0: i32) -> (i32, i32) {
    %c0_i32 = arith.constant 0 : i32
    %c0_i32_0 = arith.constant 0 : i32
    %c0_i32_1 = arith.constant 0 : i32
    return %c0_i32, %c0_i32_0 : i32, i32
  }
  func.func @transform_4(%arg0: i32) -> (i32, i32) {
    %c0_i32 = arith.constant 0 : i32
    %c0_i32_0 = arith.constant 0 : i32
    %c0_i32_1 = arith.constant 0 : i32
    return %c0_i32, %c0_i32_0 : i32, i32
  }
  func.func @transform_5(%arg0: i32) -> (i32, i32) {
    %c0_i32 = arith.constant 0 : i32
    %c0_i32_0 = arith.constant 0 : i32
    %c0_i32_1 = arith.constant 0 : i32
    return %c0_i32, %c0_i32_0 : i32, i32
  }
  func.func @transform_6(%arg0: i32) -> (i32, i32) {
    %c0_i32 = arith.constant 0 : i32
    %c0_i32_0 = arith.constant 0 : i32
    %c0_i32_1 = arith.constant 0 : i32
    return %c0_i32, %c0_i32_0 : i32, i32
  }
  func.func @transform_7(%arg0: i32) -> (i32, i32) {
    %c0_i32 = arith.constant 0 : i32
    %c0_i32_0 = arith.constant 0 : i32
    %c0_i32_1 = arith.constant 0 : i32
    return %c0_i32, %c0_i32_0 : i32, i32
  }
  func.func @transform_8(%arg0: i32) -> (i32, i32) {
    %c0_i32 = arith.constant 0 : i32
    %c0_i32_0 = arith.constant 0 : i32
    %c0_i32_1 = arith.constant 0 : i32
    return %c0_i32, %c0_i32_0 : i32, i32
  }
  func.func @transform_9(%arg0: i32) -> (i32, i32) {
    %c0_i32 = arith.constant 0 : i32
    %c0_i32_0 = arith.constant 0 : i32
    %c0_i32_1 = arith.constant 0 : i32
    return %c0_i32, %c0_i32_0 : i32, i32
  }
  func.func @transform_10(%arg0: i32) -> (i32, i32) {
    %c0_i32 = arith.constant 0 : i32
    %c0_i32_0 = arith.constant 0 : i32
    %c0_i32_1 = arith.constant 0 : i32
    return %c0_i32, %c0_i32_0 : i32, i32
  }
  func.func @transform_11(%arg0: i32) -> (i32, i32) {
    %c0_i32 = arith.constant 0 : i32
    %c0_i32_0 = arith.constant 0 : i32
    %c0_i32_1 = arith.constant 0 : i32
    return %c0_i32, %c0_i32_0 : i32, i32
  }
  func.func @transform_12(%arg0: i32) -> (i32, i32) {
    %c0_i32 = arith.constant 0 : i32
    %c0_i32_0 = arith.constant 0 : i32
    %c0_i32_1 = arith.constant 0 : i32
    return %c0_i32, %c0_i32_0 : i32, i32
  }
  func.func @transform_13(%arg0: i32) -> (i32, i32) {
    %c0_i32 = arith.constant 0 : i32
    %c0_i32_0 = arith.constant 0 : i32
    %c0_i32_1 = arith.constant 0 : i32
    return %c0_i32, %c0_i32_0 : i32, i32
  }
  func.func @transform_14(%arg0: i32) -> (i32, i32) {
    %c0_i32 = arith.constant 0 : i32
    %c0_i32_0 = arith.constant 0 : i32
    return %arg0, %c0_i32 : i32, i32
  }
}

module attributes {stable_mosaic.version = 11 : i64} {
  func.func @kernel(%arg0: i32, %arg1: memref<8x128xf32, #tpu.memory_space<vmem>>, %arg2: memref<128x128xf32, #tpu.memory_space<vmem>>, %arg3: memref<128x128xf32, #tpu.memory_space<vmem>>, %arg4: memref<128x128xf32, #tpu.memory_space<vmem>>, %arg5: memref<128x256xf32, #tpu.memory_space<vmem>>, %arg6: memref<128x128xf32, #tpu.memory_space<vmem>>, %arg7: memref<128x128xf32, #tpu.memory_space<vmem>>, %arg8: memref<128x256xf32, #tpu.memory_space<vmem>>, %arg9: memref<128x128xf32, #tpu.memory_space<vmem>>, %arg10: memref<128x128xf32, #tpu.memory_space<vmem>>, %arg11: memref<128x256xf32, #tpu.memory_space<vmem>>, %arg12: memref<128x128xf32, #tpu.memory_space<vmem>>, %arg13: memref<128x128xf32, #tpu.memory_space<vmem>>, %arg14: memref<14x256xf32, #tpu.memory_space<vmem>>, %arg15: memref<8x128xf32, #tpu.memory_space<vmem>>) attributes {dimension_semantics = [#tpu.dimension_semantics<parallel>], iteration_bounds = array<i64: 1>, scalar_prefetch = 0 : i64, scratch_operands = 0 : i64, tpu.core_type = #tpu.core_type<tc>, window_params = [{transform_indices = @transform_0, window_bounds = array<i64: 8, 128>}, {pipeline_mode = #tpu.pipeline_mode<synchronous>, transform_indices = @transform_1, window_bounds = array<i64: 128, 128>}, {pipeline_mode = #tpu.pipeline_mode<synchronous>, transform_indices = @transform_2, window_bounds = array<i64: 128, 128>}, {pipeline_mode = #tpu.pipeline_mode<synchronous>, transform_indices = @transform_3, window_bounds = array<i64: 128, 128>}, {pipeline_mode = #tpu.pipeline_mode<synchronous>, transform_indices = @transform_4, window_bounds = array<i64: 128, 256>}, {pipeline_mode = #tpu.pipeline_mode<synchronous>, transform_indices = @transform_5, window_bounds = array<i64: 128, 128>}, {pipeline_mode = #tpu.pipeline_mode<synchronous>, transform_indices = @transform_6, window_bounds = array<i64: 128, 128>}, {pipeline_mode = #tpu.pipeline_mode<synchronous>, transform_indices = @transform_7, window_bounds = array<i64: 128, 256>}, {pipeline_mode = #tpu.pipeline_mode<synchronous>, transform_indices = @transform_8, window_bounds = array<i64: 128, 128>}, {pipeline_mode = #tpu.pipeline_mode<synchronous>, transform_indices = @transform_9, window_bounds = array<i64: 128, 128>}, {pipeline_mode = #tpu.pipeline_mode<synchronous>, transform_indices = @transform_10, window_bounds = array<i64: 128, 256>}, {pipeline_mode = #tpu.pipeline_mode<synchronous>, transform_indices = @transform_11, window_bounds = array<i64: 128, 128>}, {pipeline_mode = #tpu.pipeline_mode<synchronous>, transform_indices = @transform_12, window_bounds = array<i64: 128, 128>}, {pipeline_mode = #tpu.pipeline_mode<synchronous>, transform_indices = @transform_13, window_bounds = array<i64: 14, 256>}, {transform_indices = @transform_14, window_bounds = array<i64: 8, 128>}]} {
    %c0 = arith.constant 0 : index
    %c0_0 = arith.constant 0 : index
    %0 = vector.load %arg1[%c0, %c0_0] : memref<8x128xf32, #tpu.memory_space<vmem>>, vector<8x128xf32>
    %c0_1 = arith.constant 0 : index
    %c0_2 = arith.constant 0 : index
    %1 = vector.load %arg14[%c0_1, %c0_2] : memref<14x256xf32, #tpu.memory_space<vmem>>, vector<1x128xf32>
    %c0_3 = arith.constant 0 : index
    %c0_4 = arith.constant 0 : index
    %2 = vector.load %arg2[%c0_3, %c0_4] : memref<128x128xf32, #tpu.memory_space<vmem>>, vector<128x128xf32>
    %cst = arith.constant dense<0.000000e+00> : vector<8x128xf32>
    %3 = tpu.matmul %0, %2, %cst {dimension_numbers = #tpu.dot_dimension_numbers<[1], [0], [0], [1], [0, 0, 1, 1], [], []>} : vector<8x128xf32>, vector<128x128xf32>, vector<8x128xf32> -> vector<8x128xf32>
    %4 = vector.broadcast %1 : vector<1x128xf32> to vector<8x128xf32>
    %5 = arith.addf %3, %4 : vector<8x128xf32>
    %cst_5 = arith.constant 0.000000e+00 : f32
    %6 = vector.broadcast %cst_5 : f32 to vector<8x128xf32>
    %7 = arith.maximumf %5, %6 : vector<8x128xf32>
    %c1 = arith.constant 1 : index
    %c0_6 = arith.constant 0 : index
    %8 = vector.load %arg14[%c1, %c0_6] : memref<14x256xf32, #tpu.memory_space<vmem>>, vector<1x128xf32>
    %c0_7 = arith.constant 0 : index
    %c0_8 = arith.constant 0 : index
    %9 = vector.load %arg3[%c0_7, %c0_8] : memref<128x128xf32, #tpu.memory_space<vmem>>, vector<128x128xf32>
    %cst_9 = arith.constant dense<0.000000e+00> : vector<8x128xf32>
    %10 = tpu.matmul %7, %9, %cst_9 {dimension_numbers = #tpu.dot_dimension_numbers<[1], [0], [0], [1], [0, 0, 1, 1], [], []>} : vector<8x128xf32>, vector<128x128xf32>, vector<8x128xf32> -> vector<8x128xf32>
    %11 = vector.broadcast %8 : vector<1x128xf32> to vector<8x128xf32>
    %12 = arith.addf %10, %11 : vector<8x128xf32>
    %c2 = arith.constant 2 : index
    %c0_10 = arith.constant 0 : index
    %13 = vector.load %arg14[%c2, %c0_10] : memref<14x256xf32, #tpu.memory_space<vmem>>, vector<1x128xf32>
    %c0_11 = arith.constant 0 : index
    %c0_12 = arith.constant 0 : index
    %14 = vector.load %arg4[%c0_11, %c0_12] : memref<128x128xf32, #tpu.memory_space<vmem>>, vector<128x128xf32>
    %cst_13 = arith.constant dense<0.000000e+00> : vector<8x128xf32>
    %15 = tpu.matmul %12, %14, %cst_13 {dimension_numbers = #tpu.dot_dimension_numbers<[1], [0], [0], [1], [0, 0, 1, 1], [], []>} : vector<8x128xf32>, vector<128x128xf32>, vector<8x128xf32> -> vector<8x128xf32>
    %16 = vector.broadcast %13 : vector<1x128xf32> to vector<8x128xf32>
    %17 = arith.addf %15, %16 : vector<8x128xf32>
    %cst_14 = arith.constant 0.000000e+00 : f32
    %18 = vector.broadcast %cst_14 : f32 to vector<8x128xf32>
    %19 = arith.maximumf %17, %18 : vector<8x128xf32>
    %c3 = arith.constant 3 : index
    %c0_15 = arith.constant 0 : index
    %20 = vector.load %arg14[%c3, %c0_15] : memref<14x256xf32, #tpu.memory_space<vmem>>, vector<1x256xf32>
    %c0_16 = arith.constant 0 : index
    %c0_17 = arith.constant 0 : index
    %21 = vector.load %arg5[%c0_16, %c0_17] : memref<128x256xf32, #tpu.memory_space<vmem>>, vector<128x256xf32>
    %cst_18 = arith.constant dense<0.000000e+00> : vector<8x256xf32>
    %22 = tpu.matmul %19, %21, %cst_18 {dimension_numbers = #tpu.dot_dimension_numbers<[1], [0], [0], [1], [0, 0, 1, 1], [], []>} : vector<8x128xf32>, vector<128x256xf32>, vector<8x256xf32> -> vector<8x256xf32>
    %23 = vector.broadcast %20 : vector<1x256xf32> to vector<8x256xf32>
    %24 = arith.addf %22, %23 : vector<8x256xf32>
    %25 = vector.extract_strided_slice %24 {offsets = [0, 0], sizes = [8, 128], strides = [1, 1]} : vector<8x256xf32> to vector<8x128xf32>
    %26 = vector.extract_strided_slice %24 {offsets = [0, 128], sizes = [8, 128], strides = [1, 1]} : vector<8x256xf32> to vector<8x128xf32>
    %cst_19 = arith.constant 0.000000e+00 : f32
    %27 = vector.broadcast %cst_19 : f32 to vector<8x128xf32>
    %28 = arith.subf %27, %25 : vector<8x128xf32>
    %29 = math.exp %28 : vector<8x128xf32>
    %cst_20 = arith.constant 1.000000e+00 : f32
    %30 = vector.broadcast %cst_20 : f32 to vector<8x128xf32>
    %31 = arith.addf %30, %29 : vector<8x128xf32>
    %cst_21 = arith.constant 1.000000e+00 : f32
    %32 = vector.broadcast %cst_21 : f32 to vector<8x128xf32>
    %33 = arith.divf %32, %31 : vector<8x128xf32>
    %34 = arith.mulf %7, %33 : vector<8x128xf32>
    %35 = arith.addf %34, %26 : vector<8x128xf32>
    %36 = arith.addf %35, %7 : vector<8x128xf32>
    %cst_22 = arith.constant 0.000000e+00 : f32
    %37 = vector.broadcast %cst_22 : f32 to vector<8x128xf32>
    %38 = arith.maximumf %36, %37 : vector<8x128xf32>
    %c4 = arith.constant 4 : index
    %c0_23 = arith.constant 0 : index
    %39 = vector.load %arg14[%c4, %c0_23] : memref<14x256xf32, #tpu.memory_space<vmem>>, vector<1x128xf32>
    %c0_24 = arith.constant 0 : index
    %c0_25 = arith.constant 0 : index
    %40 = vector.load %arg6[%c0_24, %c0_25] : memref<128x128xf32, #tpu.memory_space<vmem>>, vector<128x128xf32>
    %cst_26 = arith.constant dense<0.000000e+00> : vector<8x128xf32>
    %41 = tpu.matmul %38, %40, %cst_26 {dimension_numbers = #tpu.dot_dimension_numbers<[1], [0], [0], [1], [0, 0, 1, 1], [], []>} : vector<8x128xf32>, vector<128x128xf32>, vector<8x128xf32> -> vector<8x128xf32>
    %42 = vector.broadcast %39 : vector<1x128xf32> to vector<8x128xf32>
    %43 = arith.addf %41, %42 : vector<8x128xf32>
    %c5 = arith.constant 5 : index
    %c0_27 = arith.constant 0 : index
    %44 = vector.load %arg14[%c5, %c0_27] : memref<14x256xf32, #tpu.memory_space<vmem>>, vector<1x128xf32>
    %c0_28 = arith.constant 0 : index
    %c0_29 = arith.constant 0 : index
    %45 = vector.load %arg7[%c0_28, %c0_29] : memref<128x128xf32, #tpu.memory_space<vmem>>, vector<128x128xf32>
    %cst_30 = arith.constant dense<0.000000e+00> : vector<8x128xf32>
    %46 = tpu.matmul %43, %45, %cst_30 {dimension_numbers = #tpu.dot_dimension_numbers<[1], [0], [0], [1], [0, 0, 1, 1], [], []>} : vector<8x128xf32>, vector<128x128xf32>, vector<8x128xf32> -> vector<8x128xf32>
    %47 = vector.broadcast %44 : vector<1x128xf32> to vector<8x128xf32>
    %48 = arith.addf %46, %47 : vector<8x128xf32>
    %cst_31 = arith.constant 0.000000e+00 : f32
    %49 = vector.broadcast %cst_31 : f32 to vector<8x128xf32>
    %50 = arith.maximumf %48, %49 : vector<8x128xf32>
    %c6 = arith.constant 6 : index
    %c0_32 = arith.constant 0 : index
    %51 = vector.load %arg14[%c6, %c0_32] : memref<14x256xf32, #tpu.memory_space<vmem>>, vector<1x256xf32>
    %c0_33 = arith.constant 0 : index
    %c0_34 = arith.constant 0 : index
    %52 = vector.load %arg8[%c0_33, %c0_34] : memref<128x256xf32, #tpu.memory_space<vmem>>, vector<128x256xf32>
    %cst_35 = arith.constant dense<0.000000e+00> : vector<8x256xf32>
    %53 = tpu.matmul %50, %52, %cst_35 {dimension_numbers = #tpu.dot_dimension_numbers<[1], [0], [0], [1], [0, 0, 1, 1], [], []>} : vector<8x128xf32>, vector<128x256xf32>, vector<8x256xf32> -> vector<8x256xf32>
    %54 = vector.broadcast %51 : vector<1x256xf32> to vector<8x256xf32>
    %55 = arith.addf %53, %54 : vector<8x256xf32>
    %56 = vector.extract_strided_slice %55 {offsets = [0, 0], sizes = [8, 128], strides = [1, 1]} : vector<8x256xf32> to vector<8x128xf32>
    %57 = vector.extract_strided_slice %55 {offsets = [0, 128], sizes = [8, 128], strides = [1, 1]} : vector<8x256xf32> to vector<8x128xf32>
    %cst_36 = arith.constant 0.000000e+00 : f32
    %58 = vector.broadcast %cst_36 : f32 to vector<8x128xf32>
    %59 = arith.subf %58, %56 : vector<8x128xf32>
    %60 = math.exp %59 : vector<8x128xf32>
    %cst_37 = arith.constant 1.000000e+00 : f32
    %61 = vector.broadcast %cst_37 : f32 to vector<8x128xf32>
    %62 = arith.addf %61, %60 : vector<8x128xf32>
    %cst_38 = arith.constant 1.000000e+00 : f32
    %63 = vector.broadcast %cst_38 : f32 to vector<8x128xf32>
    %64 = arith.divf %63, %62 : vector<8x128xf32>
    %65 = arith.mulf %38, %64 : vector<8x128xf32>
    %66 = arith.addf %65, %57 : vector<8x128xf32>
    %67 = arith.addf %66, %38 : vector<8x128xf32>
    %cst_39 = arith.constant 0.000000e+00 : f32
    %68 = vector.broadcast %cst_39 : f32 to vector<8x128xf32>
    %69 = arith.maximumf %67, %68 : vector<8x128xf32>
    %c7 = arith.constant 7 : index
    %c0_40 = arith.constant 0 : index
    %70 = vector.load %arg14[%c7, %c0_40] : memref<14x256xf32, #tpu.memory_space<vmem>>, vector<1x128xf32>
    %c0_41 = arith.constant 0 : index
    %c0_42 = arith.constant 0 : index
    %71 = vector.load %arg9[%c0_41, %c0_42] : memref<128x128xf32, #tpu.memory_space<vmem>>, vector<128x128xf32>
    %cst_43 = arith.constant dense<0.000000e+00> : vector<8x128xf32>
    %72 = tpu.matmul %69, %71, %cst_43 {dimension_numbers = #tpu.dot_dimension_numbers<[1], [0], [0], [1], [0, 0, 1, 1], [], []>} : vector<8x128xf32>, vector<128x128xf32>, vector<8x128xf32> -> vector<8x128xf32>
    %73 = vector.broadcast %70 : vector<1x128xf32> to vector<8x128xf32>
    %74 = arith.addf %72, %73 : vector<8x128xf32>
    %c8 = arith.constant 8 : index
    %c0_44 = arith.constant 0 : index
    %75 = vector.load %arg14[%c8, %c0_44] : memref<14x256xf32, #tpu.memory_space<vmem>>, vector<1x128xf32>
    %c0_45 = arith.constant 0 : index
    %c0_46 = arith.constant 0 : index
    %76 = vector.load %arg10[%c0_45, %c0_46] : memref<128x128xf32, #tpu.memory_space<vmem>>, vector<128x128xf32>
    %cst_47 = arith.constant dense<0.000000e+00> : vector<8x128xf32>
    %77 = tpu.matmul %74, %76, %cst_47 {dimension_numbers = #tpu.dot_dimension_numbers<[1], [0], [0], [1], [0, 0, 1, 1], [], []>} : vector<8x128xf32>, vector<128x128xf32>, vector<8x128xf32> -> vector<8x128xf32>
    %78 = vector.broadcast %75 : vector<1x128xf32> to vector<8x128xf32>
    %79 = arith.addf %77, %78 : vector<8x128xf32>
    %cst_48 = arith.constant 0.000000e+00 : f32
    %80 = vector.broadcast %cst_48 : f32 to vector<8x128xf32>
    %81 = arith.maximumf %79, %80 : vector<8x128xf32>
    %c9 = arith.constant 9 : index
    %c0_49 = arith.constant 0 : index
    %82 = vector.load %arg14[%c9, %c0_49] : memref<14x256xf32, #tpu.memory_space<vmem>>, vector<1x256xf32>
    %c0_50 = arith.constant 0 : index
    %c0_51 = arith.constant 0 : index
    %83 = vector.load %arg11[%c0_50, %c0_51] : memref<128x256xf32, #tpu.memory_space<vmem>>, vector<128x256xf32>
    %cst_52 = arith.constant dense<0.000000e+00> : vector<8x256xf32>
    %84 = tpu.matmul %81, %83, %cst_52 {dimension_numbers = #tpu.dot_dimension_numbers<[1], [0], [0], [1], [0, 0, 1, 1], [], []>} : vector<8x128xf32>, vector<128x256xf32>, vector<8x256xf32> -> vector<8x256xf32>
    %85 = vector.broadcast %82 : vector<1x256xf32> to vector<8x256xf32>
    %86 = arith.addf %84, %85 : vector<8x256xf32>
    %87 = vector.extract_strided_slice %86 {offsets = [0, 0], sizes = [8, 128], strides = [1, 1]} : vector<8x256xf32> to vector<8x128xf32>
    %88 = vector.extract_strided_slice %86 {offsets = [0, 128], sizes = [8, 128], strides = [1, 1]} : vector<8x256xf32> to vector<8x128xf32>
    %cst_53 = arith.constant 0.000000e+00 : f32
    %89 = vector.broadcast %cst_53 : f32 to vector<8x128xf32>
    %90 = arith.subf %89, %87 : vector<8x128xf32>
    %91 = math.exp %90 : vector<8x128xf32>
    %cst_54 = arith.constant 1.000000e+00 : f32
    %92 = vector.broadcast %cst_54 : f32 to vector<8x128xf32>
    %93 = arith.addf %92, %91 : vector<8x128xf32>
    %cst_55 = arith.constant 1.000000e+00 : f32
    %94 = vector.broadcast %cst_55 : f32 to vector<8x128xf32>
    %95 = arith.divf %94, %93 : vector<8x128xf32>
    %96 = arith.mulf %69, %95 : vector<8x128xf32>
    %97 = arith.addf %96, %88 : vector<8x128xf32>
    %98 = arith.addf %97, %69 : vector<8x128xf32>
    %cst_56 = arith.constant 0.000000e+00 : f32
    %99 = vector.broadcast %cst_56 : f32 to vector<8x128xf32>
    %100 = arith.maximumf %98, %99 : vector<8x128xf32>
    %c10 = arith.constant 10 : index
    %c0_57 = arith.constant 0 : index
    %101 = vector.load %arg14[%c10, %c0_57] : memref<14x256xf32, #tpu.memory_space<vmem>>, vector<1x128xf32>
    %c0_58 = arith.constant 0 : index
    %c0_59 = arith.constant 0 : index
    %102 = vector.load %arg12[%c0_58, %c0_59] : memref<128x128xf32, #tpu.memory_space<vmem>>, vector<128x128xf32>
    %cst_60 = arith.constant dense<0.000000e+00> : vector<8x128xf32>
    %103 = tpu.matmul %100, %102, %cst_60 {dimension_numbers = #tpu.dot_dimension_numbers<[1], [0], [0], [1], [0, 0, 1, 1], [], []>} : vector<8x128xf32>, vector<128x128xf32>, vector<8x128xf32> -> vector<8x128xf32>
    %104 = vector.broadcast %101 : vector<1x128xf32> to vector<8x128xf32>
    %105 = arith.addf %103, %104 : vector<8x128xf32>
    %cst_61 = arith.constant 0.000000e+00 : f32
    %106 = vector.broadcast %cst_61 : f32 to vector<8x128xf32>
    %107 = arith.maximumf %105, %106 : vector<8x128xf32>
    %c11 = arith.constant 11 : index
    %c0_62 = arith.constant 0 : index
    %108 = vector.load %arg14[%c11, %c0_62] : memref<14x256xf32, #tpu.memory_space<vmem>>, vector<1x128xf32>
    %c0_63 = arith.constant 0 : index
    %c0_64 = arith.constant 0 : index
    %109 = vector.load %arg13[%c0_63, %c0_64] : memref<128x128xf32, #tpu.memory_space<vmem>>, vector<128x128xf32>
    %cst_65 = arith.constant dense<0.000000e+00> : vector<8x128xf32>
    %110 = tpu.matmul %107, %109, %cst_65 {dimension_numbers = #tpu.dot_dimension_numbers<[1], [0], [0], [1], [0, 0, 1, 1], [], []>} : vector<8x128xf32>, vector<128x128xf32>, vector<8x128xf32> -> vector<8x128xf32>
    %111 = vector.broadcast %108 : vector<1x128xf32> to vector<8x128xf32>
    %112 = arith.addf %110, %111 : vector<8x128xf32>
    %cst_66 = arith.constant dense<0.000000e+00> : vector<8xf32>
    %113 = vector.multi_reduction <add>, %112, %cst_66 [1] : vector<8x128xf32> to vector<8xf32>
    %114 = vector.shape_cast %113 : vector<8xf32> to vector<8x1xf32>
    %cst_67 = arith.constant 1.000000e-01 : f32
    %115 = vector.broadcast %cst_67 : f32 to vector<8x1xf32>
    %116 = arith.mulf %114, %115 : vector<8x1xf32>
    %c12 = arith.constant 12 : index
    %c0_68 = arith.constant 0 : index
    %117 = vector.load %arg14[%c12, %c0_68] : memref<14x256xf32, #tpu.memory_space<vmem>>, vector<1x128xf32>
    %c13 = arith.constant 13 : index
    %c0_69 = arith.constant 0 : index
    %118 = vector.load %arg14[%c13, %c0_69] : memref<14x256xf32, #tpu.memory_space<vmem>>, vector<1x1xf32>
    %119 = vector.broadcast %117 : vector<1x128xf32> to vector<8x128xf32>
    %120 = arith.mulf %107, %119 : vector<8x128xf32>
    %cst_70 = arith.constant dense<0.000000e+00> : vector<8xf32>
    %121 = vector.multi_reduction <add>, %120, %cst_70 [1] : vector<8x128xf32> to vector<8xf32>
    %122 = vector.shape_cast %121 : vector<8xf32> to vector<8x1xf32>
    %123 = vector.broadcast %118 : vector<1x1xf32> to vector<8x1xf32>
    %124 = arith.addf %122, %123 : vector<8x1xf32>
    %125 = vector.broadcast %116 : vector<8x1xf32> to vector<8x128xf32>
    %126 = arith.subf %112, %125 : vector<8x128xf32>
    %127 = vector.broadcast %124 : vector<8x1xf32> to vector<8x128xf32>
    %128 = arith.addf %126, %127 : vector<8x128xf32>
    %c0_71 = arith.constant 0 : index
    %c0_72 = arith.constant 0 : index
    %129 = vector.load %arg15[%c0_71, %c0_72] : memref<8x128xf32, #tpu.memory_space<vmem>>, vector<8x128xf32>
    tpu.vector_store %arg15[%c0_71, %c0_72], %128 {strides = array<i32>} : memref<8x128xf32, #tpu.memory_space<vmem>>, vector<8x128xf32>,
    return
  }
  func.func @transform_0(%arg0: i32) -> (i32, i32) {
    %c0_i32 = arith.constant 0 : i32
    %c0_i32_0 = arith.constant 0 : i32
    return %arg0, %c0_i32 : i32, i32
  }
  func.func @transform_1(%arg0: i32) -> (i32, i32) {
    %c0_i32 = arith.constant 0 : i32
    %c0_i32_0 = arith.constant 0 : i32
    %c0_i32_1 = arith.constant 0 : i32
    return %c0_i32, %c0_i32_0 : i32, i32
  }
  func.func @transform_2(%arg0: i32) -> (i32, i32) {
    %c0_i32 = arith.constant 0 : i32
    %c0_i32_0 = arith.constant 0 : i32
    %c0_i32_1 = arith.constant 0 : i32
    return %c0_i32, %c0_i32_0 : i32, i32
  }
  func.func @transform_3(%arg0: i32) -> (i32, i32) {
    %c0_i32 = arith.constant 0 : i32
    %c0_i32_0 = arith.constant 0 : i32
    %c0_i32_1 = arith.constant 0 : i32
    return %c0_i32, %c0_i32_0 : i32, i32
  }
  func.func @transform_4(%arg0: i32) -> (i32, i32) {
    %c0_i32 = arith.constant 0 : i32
    %c0_i32_0 = arith.constant 0 : i32
    %c0_i32_1 = arith.constant 0 : i32
    return %c0_i32, %c0_i32_0 : i32, i32
  }
  func.func @transform_5(%arg0: i32) -> (i32, i32) {
    %c0_i32 = arith.constant 0 : i32
    %c0_i32_0 = arith.constant 0 : i32
    %c0_i32_1 = arith.constant 0 : i32
    return %c0_i32, %c0_i32_0 : i32, i32
  }
  func.func @transform_6(%arg0: i32) -> (i32, i32) {
    %c0_i32 = arith.constant 0 : i32
    %c0_i32_0 = arith.constant 0 : i32
    %c0_i32_1 = arith.constant 0 : i32
    return %c0_i32, %c0_i32_0 : i32, i32
  }
  func.func @transform_7(%arg0: i32) -> (i32, i32) {
    %c0_i32 = arith.constant 0 : i32
    %c0_i32_0 = arith.constant 0 : i32
    %c0_i32_1 = arith.constant 0 : i32
    return %c0_i32, %c0_i32_0 : i32, i32
  }
  func.func @transform_8(%arg0: i32) -> (i32, i32) {
    %c0_i32 = arith.constant 0 : i32
    %c0_i32_0 = arith.constant 0 : i32
    %c0_i32_1 = arith.constant 0 : i32
    return %c0_i32, %c0_i32_0 : i32, i32
  }
  func.func @transform_9(%arg0: i32) -> (i32, i32) {
    %c0_i32 = arith.constant 0 : i32
    %c0_i32_0 = arith.constant 0 : i32
    %c0_i32_1 = arith.constant 0 : i32
    return %c0_i32, %c0_i32_0 : i32, i32
  }
  func.func @transform_10(%arg0: i32) -> (i32, i32) {
    %c0_i32 = arith.constant 0 : i32
    %c0_i32_0 = arith.constant 0 : i32
    %c0_i32_1 = arith.constant 0 : i32
    return %c0_i32, %c0_i32_0 : i32, i32
  }
  func.func @transform_11(%arg0: i32) -> (i32, i32) {
    %c0_i32 = arith.constant 0 : i32
    %c0_i32_0 = arith.constant 0 : i32
    %c0_i32_1 = arith.constant 0 : i32
    return %c0_i32, %c0_i32_0 : i32, i32
  }
  func.func @transform_12(%arg0: i32) -> (i32, i32) {
    %c0_i32 = arith.constant 0 : i32
    %c0_i32_0 = arith.constant 0 : i32
    %c0_i32_1 = arith.constant 0 : i32
    return %c0_i32, %c0_i32_0 : i32, i32
  }
  func.func @transform_13(%arg0: i32) -> (i32, i32) {
    %c0_i32 = arith.constant 0 : i32
    %c0_i32_0 = arith.constant 0 : i32
    %c0_i32_1 = arith.constant 0 : i32
    return %c0_i32, %c0_i32_0 : i32, i32
  }
  func.func @transform_14(%arg0: i32) -> (i32, i32) {
    %c0_i32 = arith.constant 0 : i32
    %c0_i32_0 = arith.constant 0 : i32
    return %arg0, %c0_i32 : i32, i32
  }
}

</mosaic_0001>

<llo_original>
// kernel: state_action_forward.1
$region0: #{state_action_forward.1}
  #allocation0 [shape = 'u32[]', space=smem, size = 0x4, offset = 0x4, fixed_abs, tag = 'smem constant byte address 0x4 - core index']
  #allocation1 [shape = 'u32[72,128]{1,0:T(1,128)}', space=vmem, size = 0x9000, scoped, tag = 'internal scratch']
  %s0 = inlined_call_operand.vmem [shape: f32[8,128], index: 0, kind: input, shape index: {}]
  %s1 = inlined_call_operand.hbm [shape: f32[128,128], index: 1, kind: input, shape index: {}]
  %s2 = inlined_call_operand.hbm [shape: f32[128,128], index: 2, kind: input, shape index: {}]
  %s3 = inlined_call_operand.hbm [shape: f32[128,128], index: 3, kind: input, shape index: {}]
  %s4 = inlined_call_operand.hbm [shape: f32[128,256], index: 4, kind: input, shape index: {}]
  %s5 = inlined_call_operand.hbm [shape: f32[128,128], index: 5, kind: input, shape index: {}]
  %s6 = inlined_call_operand.hbm [shape: f32[128,128], index: 6, kind: input, shape index: {}]
  %s7 = inlined_call_operand.hbm [shape: f32[128,256], index: 7, kind: input, shape index: {}]
  %s8 = inlined_call_operand.hbm [shape: f32[128,128], index: 8, kind: input, shape index: {}]
  %s9 = inlined_call_operand.hbm [shape: f32[128,128], index: 9, kind: input, shape index: {}]
  %s10 = inlined_call_operand.hbm [shape: f32[128,256], index: 10, kind: input, shape index: {}]
  %s11 = inlined_call_operand.hbm [shape: f32[128,128], index: 11, kind: input, shape index: {}]
  %s12 = inlined_call_operand.hbm [shape: f32[128,128], index: 12, kind: input, shape index: {}]
  %s13 = inlined_call_operand.vmem [shape: f32[14,256], index: 13, kind: input, shape index: {}]
  %s14 = inlined_call_operand.hbm [shape: f32[8,128], index: 14, kind: output, shape index: {}]
  %s15 = sld [smem:[#allocation0]]
  $region114: #{state_action_forward.1} parent=0
    _
  %s17 = ssub.s32 1, %s15
  %s18 = scalar_select 0, %s17, %s15
  $region1: #{state_action_forward.1} parent=0
    #allocation2 [shape = 'u8[65536]{0}', space=vmem, size = 0x10000, scoped, tag = 'input window, operand 1, single buffered']
    #allocation3 [shape = 's32[1]{0}', space=sflag, size = 0x4, scoped, tag = 'scoped memory for state_action_forward.1']
    #allocation4 [shape = 's32[1]{0}', space=sflag, size = 0x4, scoped, tag = 'scoped memory for state_action_forward.1']
    #allocation5 [shape = 'u8[65536]{0}', space=vmem, size = 0x10000, scoped, tag = 'input window, operand 2, single buffered']
    #allocation6 [shape = 's32[1]{0}', space=sflag, size = 0x4, scoped, tag = 'scoped memory for state_action_forward.1']
    #allocation7 [shape = 'u8[65536]{0}', space=vmem, size = 0x10000, scoped, tag = 'input window, operand 3, single buffered']
    #allocation8 [shape = 'u8[131072]{0}', space=vmem, size = 0x20000, scoped, tag = 'input window, operand 4, single buffered']
    #allocation9 [shape = 's32[1]{0}', space=sflag, size = 0x4, scoped, tag = 'scoped memory for state_action_forward.1']
    #allocation10 [shape = 'u8[65536]{0}', space=vmem, size = 0x10000, scoped, tag = 'input window, operand 5, single buffered']
    #allocation11 [shape = 'u8[65536]{0}', space=vmem, size = 0x10000, scoped, tag = 'input window, operand 6, single buffered']
    #allocation12 [shape = 's32[1]{0}', space=sflag, size = 0x4, scoped, tag = 'scoped memory for state_action_forward.1']
    #allocation13 [shape = 'u8[131072]{0}', space=vmem, size = 0x20000, scoped, tag = 'input window, operand 7, single buffered']
    #allocation14 [shape = 'u8[65536]{0}', space=vmem, size = 0x10000, scoped, tag = 'input window, operand 8, single buffered']
    #allocation15 [shape = 's32[1]{0}', space=sflag, size = 0x4, scoped, tag = 'scoped memory for state_action_forward.1']
    #allocation16 [shape = 'u8[65536]{0}', space=vmem, size = 0x10000, scoped, tag = 'input window, operand 9, single buffered']
    #allocation17 [shape = 'u8[131072]{0}', space=vmem, size = 0x20000, scoped, tag = 'input window, operand 10, single buffered']
    #allocation18 [shape = 's32[1]{0}', space=sflag, size = 0x4, scoped, tag = 'scoped memory for state_action_forward.1']
    #allocation19 [shape = 'u8[65536]{0}', space=vmem, size = 0x10000, scoped, tag = 'input window, operand 11, single buffered']
    #allocation20 [shape = 'u8[65536]{0}', space=vmem, size = 0x10000, scoped, tag = 'input window, operand 12, single buffered']
    #allocation21 [shape = 's32[1]{0}', space=sflag, size = 0x4, scoped, tag = 'scoped memory for state_action_forward.1']
    #allocation22 [shape = 'u8[4096]{0}', space=vmem, size = 0x1000, scoped, tag = 'output window, operand 0, single buffered']
    %19 = vsyncpa [#allocation3], 0
    %20 = vsyncpa [#allocation6], 0
    %21 = vsyncpa [#allocation9], 0
    %22 = vsyncpa [#allocation12], 0
    %23 = vsyncpa [#allocation15], 0
    %24 = vsyncpa [#allocation18], 0
    %25 = vsyncpa [#allocation21], 0
    %26 = vsyncpa [#allocation4], 0
    // Predicated region
    $region2: #{state_action_forward.1} parent=1 // pred_check
      _
    $region3: #{state_action_forward.1} parent=1 // pred_check_branch
      %28 = sbr.rel (0) target = $region5
    $region4: #{state_action_forward.1} parent=1 // pred_region
      _
    $region5: #{state_action_forward.1} parent=1 // pred_fallthru
      _
    // Predicated region
    $region6: #{state_action_forward.1} parent=1 // pred_check
      _
    $region7: #{state_action_forward.1} parent=1 // pred_check_branch
      %30 = sbr.rel (0) target = $region9
    $region8: #{state_action_forward.1} parent=1 // pred_region
      %32 = vsyncadd [#allocation3], 0
      %s33 = sshll.u32 %s1, 4
      %s34 = int_to_ptr.hbm [resolvable:$true] %s33
      %s35 = sshll.u32 [#allocation2], 4
      %s36 = int_to_ptr.vmem [resolvable:$true] %s35
      %41 = dma.hbm_to_vmem [thread:$0]  %s34, 2048, %s36, [#allocation3], 128, 128, 8
    $region9: #{state_action_forward.1} parent=1 // pred_fallthru
      _
    // Predicated region
    $region10: #{state_action_forward.1} parent=1 // pred_check
      _
    $region11: #{state_action_forward.1} parent=1 // pred_check_branch
      %43 = sbr.rel (0) target = $region13
    $region12: #{state_action_forward.1} parent=1 // pred_region
      %45 = vsyncadd [#allocation6], 0
      %s46 = sshll.u32 %s2, 4
      %s47 = int_to_ptr.hbm [resolvable:$true] %s46
      %s48 = sshll.u32 [#allocation5], 4
      %s49 = int_to_ptr.vmem [resolvable:$true] %s48
      %54 = dma.hbm_to_vmem [thread:$0]  %s47, 2048, %s49, [#allocation6], 128, 128, 8
    $region13: #{state_action_forward.1} parent=1 // pred_fallthru
      _
    // Predicated region
    $region14: #{state_action_forward.1} parent=1 // pred_check
      _
    $region15: #{state_action_forward.1} parent=1 // pred_check_branch
      %56 = sbr.rel (0) target = $region17
    $region16: #{state_action_forward.1} parent=1 // pred_region
      %58 = vsyncadd [#allocation6], 0
      %s59 = sshll.u32 %s3, 4
      %s60 = int_to_ptr.hbm [resolvable:$true] %s59
      %s61 = sshll.u32 [#allocation7], 4
      %s62 = int_to_ptr.vmem [resolvable:$true] %s61
      %67 = dma.hbm_to_vmem [thread:$0]  %s60, 2048, %s62, [#allocation6], 128, 128, 8
    $region17: #{state_action_forward.1} parent=1 // pred_fallthru
      _
    // Predicated region
    $region18: #{state_action_forward.1} parent=1 // pred_check
      _
    $region19: #{state_action_forward.1} parent=1 // pred_check_branch
      %69 = sbr.rel (0) target = $region21
    $region20: #{state_action_forward.1} parent=1 // pred_region
      %71 = vsyncadd [#allocation9], 0
      %s72 = sshll.u32 %s4, 4
      %s73 = int_to_ptr.hbm [resolvable:$true] %s72
      %s74 = sshll.u32 [#allocation8], 4
      %s75 = int_to_ptr.vmem [resolvable:$true] %s74
      %80 = dma.hbm_to_vmem [thread:$0]  %s73, 4096, %s75, [#allocation9], 256, 256, 16
    $region21: #{state_action_forward.1} parent=1 // pred_fallthru
      _
    // Predicated region
    $region22: #{state_action_forward.1} parent=1 // pred_check
      _
    $region23: #{state_action_forward.1} parent=1 // pred_check_branch
      %82 = sbr.rel (0) target = $region25
    $region24: #{state_action_forward.1} parent=1 // pred_region
      %84 = vsyncadd [#allocation9], 0
      %s85 = sshll.u32 %s5, 4
      %s86 = int_to_ptr.hbm [resolvable:$true] %s85
      %s87 = sshll.u32 [#allocation10], 4
      %s88 = int_to_ptr.vmem [resolvable:$true] %s87
      %93 = dma.hbm_to_vmem [thread:$0]  %s86, 2048, %s88, [#allocation9], 128, 128, 8
    $region25: #{state_action_forward.1} parent=1 // pred_fallthru
      _
    // Predicated region
    $region26: #{state_action_forward.1} parent=1 // pred_check
      _
    $region27: #{state_action_forward.1} parent=1 // pred_check_branch
      %95 = sbr.rel (0) target = $region29
    $region28: #{state_action_forward.1} parent=1 // pred_region
      %97 = vsyncadd [#allocation12], 0
      %s98 = sshll.u32 %s6, 4
      %s99 = int_to_ptr.hbm [resolvable:$true] %s98
      %s100 = sshll.u32 [#allocation11], 4
      %s101 = int_to_ptr.vmem [resolvable:$true] %s100
      %106 = dma.hbm_to_vmem [thread:$0]  %s99, 2048, %s101, [#allocation12], 128, 128, 8
    $region29: #{state_action_forward.1} parent=1 // pred_fallthru
      _
    // Predicated region
    $region30: #{state_action_forward.1} parent=1 // pred_check
      _
    $region31: #{state_action_forward.1} parent=1 // pred_check_branch
      %108 = sbr.rel (0) target = $region33
    $region32: #{state_action_forward.1} parent=1 // pred_region
      %110 = vsyncadd [#allocation12], 0
      %s111 = sshll.u32 %s7, 4
      %s112 = int_to_ptr.hbm [resolvable:$true] %s111
      %s113 = sshll.u32 [#allocation13], 4
      %s114 = int_to_ptr.vmem [resolvable:$true] %s113
      %119 = dma.hbm_to_vmem [thread:$0]  %s112, 4096, %s114, [#allocation12], 256, 256, 16
    $region33: #{state_action_forward.1} parent=1 // pred_fallthru
      _
    // Predicated region
    $region34: #{state_action_forward.1} parent=1 // pred_check
      _
    $region35: #{state_action_forward.1} parent=1 // pred_check_branch
      %121 = sbr.rel (0) target = $region37
    $region36: #{state_action_forward.1} parent=1 // pred_region
      %123 = vsyncadd [#allocation15], 0
      %s124 = sshll.u32 %s8, 4
      %s125 = int_to_ptr.hbm [resolvable:$true] %s124
      %s126 = sshll.u32 [#allocation14], 4
      %s127 = int_to_ptr.vmem [resolvable:$true] %s126
      %132 = dma.hbm_to_vmem [thread:$0]  %s125, 2048, %s127, [#allocation15], 128, 128, 8
    $region37: #{state_action_forward.1} parent=1 // pred_fallthru
      _
    // Predicated region
    $region38: #{state_action_forward.1} parent=1 // pred_check
      _
    $region39: #{state_action_forward.1} parent=1 // pred_check_branch
      %134 = sbr.rel (0) target = $region41
    $region40: #{state_action_forward.1} parent=1 // pred_region
      %136 = vsyncadd [#allocation15], 0
      %s137 = sshll.u32 %s9, 4
      %s138 = int_to_ptr.hbm [resolvable:$true] %s137
      %s139 = sshll.u32 [#allocation16], 4
      %s140 = int_to_ptr.vmem [resolvable:$true] %s139
      %145 = dma.hbm_to_vmem [thread:$0]  %s138, 2048, %s140, [#allocation15], 128, 128, 8
    $region41: #{state_action_forward.1} parent=1 // pred_fallthru
      _
    // Predicated region
    $region42: #{state_action_forward.1} parent=1 // pred_check
      _
    $region43: #{state_action_forward.1} parent=1 // pred_check_branch
      %147 = sbr.rel (0) target = $region45
    $region44: #{state_action_forward.1} parent=1 // pred_region
      %149 = vsyncadd [#allocation18], 0
      %s150 = sshll.u32 %s10, 4
      %s151 = int_to_ptr.hbm [resolvable:$true] %s150
      %s152 = sshll.u32 [#allocation17], 4
      %s153 = int_to_ptr.vmem [resolvable:$true] %s152
      %158 = dma.hbm_to_vmem [thread:$0]  %s151, 4096, %s153, [#allocation18], 256, 256, 16
    $region45: #{state_action_forward.1} parent=1 // pred_fallthru
      _
    // Predicated region
    $region46: #{state_action_forward.1} parent=1 // pred_check
      _
    $region47: #{state_action_forward.1} parent=1 // pred_check_branch
      %160 = sbr.rel (0) target = $region49
    $region48: #{state_action_forward.1} parent=1 // pred_region
      %162 = vsyncadd [#allocation18], 0
      %s163 = sshll.u32 %s11, 4
      %s164 = int_to_ptr.hbm [resolvable:$true] %s163
      %s165 = sshll.u32 [#allocation19], 4
      %s166 = int_to_ptr.vmem [resolvable:$true] %s165
      %171 = dma.hbm_to_vmem [thread:$0]  %s164, 2048, %s166, [#allocation18], 128, 128, 8
    $region49: #{state_action_forward.1} parent=1 // pred_fallthru
      _
    // Predicated region
    $region50: #{state_action_forward.1} parent=1 // pred_check
      _
    $region51: #{state_action_forward.1} parent=1 // pred_check_branch
      %173 = sbr.rel (0) target = $region53
    $region52: #{state_action_forward.1} parent=1 // pred_region
      %175 = vsyncadd [#allocation21], 0
      %s176 = sshll.u32 %s12, 4
      %s177 = int_to_ptr.hbm [resolvable:$true] %s176
      %s178 = sshll.u32 [#allocation20], 4
      %s179 = int_to_ptr.vmem [resolvable:$true] %s178
      %184 = dma.hbm_to_vmem [thread:$0]  %s177, 2048, %s179, [#allocation21], 128, 128, 8
    $region53: #{state_action_forward.1} parent=1 // pred_fallthru
      _
    // Predicated region
    $region54: #{state_action_forward.1} parent=1 // pred_check
      _
    $region55: #{state_action_forward.1} parent=1 // pred_check_branch
      %186 = sbr.rel (0) target = $region57
    $region56: #{state_action_forward.1} parent=1 // pred_region
      _
    $region57: #{state_action_forward.1} parent=1 // pred_fallthru
      _
    // Predicated region
    $region58: #{state_action_forward.1} parent=1 // pred_check
      _
    $region59: #{state_action_forward.1} parent=1 // pred_check_branch
      %188 = sbr.rel (0) target = $region61
    $region60: #{state_action_forward.1} parent=1 // pred_region
      %190 = dma.done [#allocation3], 2048
    $region61: #{state_action_forward.1} parent=1 // pred_fallthru
      _
    // Predicated region
    $region62: #{state_action_forward.1} parent=1 // pred_check
      _
    $region63: #{state_action_forward.1} parent=1 // pred_check_branch
      %192 = sbr.rel (0) target = $region65
    $region64: #{state_action_forward.1} parent=1 // pred_region
      %194 = dma.done [#allocation6], 2048
    $region65: #{state_action_forward.1} parent=1 // pred_fallthru
      _
    // Predicated region
    $region66: #{state_action_forward.1} parent=1 // pred_check
      _
    $region67: #{state_action_forward.1} parent=1 // pred_check_branch
      %196 = sbr.rel (0) target = $region69
    $region68: #{state_action_forward.1} parent=1 // pred_region
      %198 = dma.done [#allocation6], 2048
    $region69: #{state_action_forward.1} parent=1 // pred_fallthru
      _
    // Predicated region
    $region70: #{state_action_forward.1} parent=1 // pred_check
      _
    $region71: #{state_action_forward.1} parent=1 // pred_check_branch
      %200 = sbr.rel (0) target = $region73
    $region72: #{state_action_forward.1} parent=1 // pred_region
      %202 = dma.done [#allocation9], 4096
    $region73: #{state_action_forward.1} parent=1 // pred_fallthru
      _
    // Predicated region
    $region74: #{state_action_forward.1} parent=1 // pred_check
      _
    $region75: #{state_action_forward.1} parent=1 // pred_check_branch
      %204 = sbr.rel (0) target = $region77
    $region76: #{state_action_forward.1} parent=1 // pred_region
      %206 = dma.done [#allocation9], 2048
    $region77: #{state_action_forward.1} parent=1 // pred_fallthru
      _
    // Predicated region
    $region78: #{state_action_forward.1} parent=1 // pred_check
      _
    $region79: #{state_action_forward.1} parent=1 // pred_check_branch
      %208 = sbr.rel (0) target = $region81
    $region80: #{state_action_forward.1} parent=1 // pred_region
      %210 = dma.done [#allocation12], 2048
    $region81: #{state_action_forward.1} parent=1 // pred_fallthru
      _
    // Predicated region
    $region82: #{state_action_forward.1} parent=1 // pred_check
      _
    $region83: #{state_action_forward.1} parent=1 // pred_check_branch
      %212 = sbr.rel (0) target = $region85
    $region84: #{state_action_forward.1} parent=1 // pred_region
      %214 = dma.done [#allocation12], 4096
    $region85: #{state_action_forward.1} parent=1 // pred_fallthru
      _
    // Predicated region
    $region86: #{state_action_forward.1} parent=1 // pred_check
      _
    $region87: #{state_action_forward.1} parent=1 // pred_check_branch
      %216 = sbr.rel (0) target = $region89
    $region88: #{state_action_forward.1} parent=1 // pred_region
      %218 = dma.done [#allocation15], 2048
    $region89: #{state_action_forward.1} parent=1 // pred_fallthru
      _
    // Predicated region
    $region90: #{state_action_forward.1} parent=1 // pred_check
      _
    $region91: #{state_action_forward.1} parent=1 // pred_check_branch
      %220 = sbr.rel (0) target = $region93
    $region92: #{state_action_forward.1} parent=1 // pred_region
      %222 = dma.done [#allocation15], 2048
    $region93: #{state_action_forward.1} parent=1 // pred_fallthru
      _
    // Predicated region
    $region94: #{state_action_forward.1} parent=1 // pred_check
      _
    $region95: #{state_action_forward.1} parent=1 // pred_check_branch
      %224 = sbr.rel (0) target = $region97
    $region96: #{state_action_forward.1} parent=1 // pred_region
      %226 = dma.done [#allocation18], 4096
    $region97: #{state_action_forward.1} parent=1 // pred_fallthru
      _
    // Predicated region
    $region98: #{state_action_forward.1} parent=1 // pred_check
      _
    $region99: #{state_action_forward.1} parent=1 // pred_check_branch
      %228 = sbr.rel (0) target = $region101
    $region100: #{state_action_forward.1} parent=1 // pred_region
      %230 = dma.done [#allocation18], 2048
    $region101: #{state_action_forward.1} parent=1 // pred_fallthru
      _
    // Predicated region
    $region102: #{state_action_forward.1} parent=1 // pred_check
      _
    $region103: #{state_action_forward.1} parent=1 // pred_check_branch
      %232 = sbr.rel (0) target = $region105
    $region104: #{state_action_forward.1} parent=1 // pred_region
      %234 = dma.done [#allocation21], 2048
    $region105: #{state_action_forward.1} parent=1 // pred_fallthru
      _
    %v235 = vld [vmem:[%s0] sm:$0xff]
    %v236 = vld [vmem:[%s13] ss:$0 sm:$0xff]
    %v237 = vld [vmem:[#allocation2] sm:$0xff]
    %v238 = vld [vmem:[#allocation2 + $0x8] sm:$0xff]
    %v239 = vld [vmem:[#allocation2 + $0x10] sm:$0xff]
    %v240 = vld [vmem:[#allocation2 + $0x18] sm:$0xff]
    %v241 = vld [vmem:[#allocation2 + $0x20] sm:$0xff]
    %v242 = vld [vmem:[#allocation2 + $0x28] sm:$0xff]
    %v243 = vld [vmem:[#allocation2 + $0x30] sm:$0xff]
    %v244 = vld [vmem:[#allocation2 + $0x38] sm:$0xff]
    %v245 = vld [vmem:[#allocation2 + $0x40] sm:$0xff]
    %v246 = vld [vmem:[#allocation2 + $0x48] sm:$0xff]
    %v247 = vld [vmem:[#allocation2 + $0x50] sm:$0xff]
    %v248 = vld [vmem:[#allocation2 + $0x58] sm:$0xff]
    %v249 = vld [vmem:[#allocation2 + $0x60] sm:$0xff]
    %v250 = vld [vmem:[#allocation2 + $0x68] sm:$0xff]
    %v251 = vld [vmem:[#allocation2 + $0x70] sm:$0xff]
    %v252 = vld [vmem:[#allocation2 + $0x78] sm:$0xff]
    %253 = vmatpush.msra.mxu0 %v252
    %254 = vmatpush.msra.mxu0 %v251
    %255 = vmatpush.msra.mxu0 %v250
    %256 = vmatpush.msra.mxu0 %v249
    %257 = vmatpush.msra.mxu0 %v248
    %258 = vmatpush.msra.mxu0 %v247
    %259 = vmatpush.msra.mxu0 %v246
    %260 = vmatpush.msra.mxu0 %v245
    %261 = vmatpush.msra.mxu0 %v244
    %262 = vmatpush.msra.mxu0 %v243
    %263 = vmatpush.msra.mxu0 %v242
    %264 = vmatpush.msra.mxu0 %v241
    %265 = vmatpush.msra.mxu0 %v240
    %266 = vmatpush.msra.mxu0 %v239
    %267 = vmatpush.msra.mxu0 %v238
    %268 = vmatpush.msra.mxu0 %v237
    %269 = vmatmul.f32.gmra.mxu0 %v235
    %v270 = vpop.f32.mrf.mxu0
    %v271 = vadd.f32 %v236, %v270
    %272 = vdwg.mxu0
    %v273 = vmax.f32 %v271, 0.0
    %v274 = vld [vmem:[%s13 + $0x1] ss:$0 sm:$0xff]
    %v275 = vld [vmem:[#allocation5] sm:$0xff]
    %v276 = vld [vmem:[#allocation5 + $0x8] sm:$0xff]
    %v277 = vld [vmem:[#allocation5 + $0x10] sm:$0xff]
    %v278 = vld [vmem:[#allocation5 + $0x18] sm:$0xff]
    %v279 = vld [vmem:[#allocation5 + $0x20] sm:$0xff]
    %v280 = vld [vmem:[#allocation5 + $0x28] sm:$0xff]
    %v281 = vld [vmem:[#allocation5 + $0x30] sm:$0xff]
    %v282 = vld [vmem:[#allocation5 + $0x38] sm:$0xff]
    %v283 = vld [vmem:[#allocation5 + $0x40] sm:$0xff]
    %v284 = vld [vmem:[#allocation5 + $0x48] sm:$0xff]
    %v285 = vld [vmem:[#allocation5 + $0x50] sm:$0xff]
    %v286 = vld [vmem:[#allocation5 + $0x58] sm:$0xff]
    %v287 = vld [vmem:[#allocation5 + $0x60] sm:$0xff]
    %v288 = vld [vmem:[#allocation5 + $0x68] sm:$0xff]
    %v289 = vld [vmem:[#allocation5 + $0x70] sm:$0xff]
    %v290 = vld [vmem:[#allocation5 + $0x78] sm:$0xff]
    %291 = vmatpush.msra.mxu0 %v290
    %292 = vmatpush.msra.mxu0 %v289
    %293 = vmatpush.msra.mxu0 %v288
    %294 = vmatpush.msra.mxu0 %v287
    %295 = vmatpush.msra.mxu0 %v286
    %296 = vmatpush.msra.mxu0 %v285
    %297 = vmatpush.msra.mxu0 %v284
    %298 = vmatpush.msra.mxu0 %v283
    %299 = vmatpush.msra.mxu0 %v282
    %300 = vmatpush.msra.mxu0 %v281
    %301 = vmatpush.msra.mxu0 %v280
    %302 = vmatpush.msra.mxu0 %v279
    %303 = vmatpush.msra.mxu0 %v278
    %304 = vmatpush.msra.mxu0 %v277
    %305 = vmatpush.msra.mxu0 %v276
    %306 = vmatpush.msra.mxu0 %v275
    %307 = vmatmul.f32.gmra.mxu0 %v273
    %v308 = vpop.f32.mrf.mxu0
    %v309 = vadd.f32 %v274, %v308
    %310 = vdwg.mxu0
    %v311 = vld [vmem:[%s13 + $0x2] ss:$0 sm:$0xff]
    %v312 = vld [vmem:[#allocation7] sm:$0xff]
    %v313 = vld [vmem:[#allocation7 + $0x8] sm:$0xff]
    %v314 = vld [vmem:[#allocation7 + $0x10] sm:$0xff]
    %v315 = vld [vmem:[#allocation7 + $0x18] sm:$0xff]
    %v316 = vld [vmem:[#allocation7 + $0x20] sm:$0xff]
    %v317 = vld [vmem:[#allocation7 + $0x28] sm:$0xff]
    %v318 = vld [vmem:[#allocation7 + $0x30] sm:$0xff]
    %v319 = vld [vmem:[#allocation7 + $0x38] sm:$0xff]
    %v320 = vld [vmem:[#allocation7 + $0x40] sm:$0xff]
    %v321 = vld [vmem:[#allocation7 + $0x48] sm:$0xff]
    %v322 = vld [vmem:[#allocation7 + $0x50] sm:$0xff]
    %v323 = vld [vmem:[#allocation7 + $0x58] sm:$0xff]
    %v324 = vld [vmem:[#allocation7 + $0x60] sm:$0xff]
    %v325 = vld [vmem:[#allocation7 + $0x68] sm:$0xff]
    %v326 = vld [vmem:[#allocation7 + $0x70] sm:$0xff]
    %v327 = vld [vmem:[#allocation7 + $0x78] sm:$0xff]
    %328 = vmatpush.msra.mxu0 %v327
    %329 = vmatpush.msra.mxu0 %v326
    %330 = vmatpush.msra.mxu0 %v325
    %331 = vmatpush.msra.mxu0 %v324
    %332 = vmatpush.msra.mxu0 %v323
    %333 = vmatpush.msra.mxu0 %v322
    %334 = vmatpush.msra.mxu0 %v321
    %335 = vmatpush.msra.mxu0 %v320
    %336 = vmatpush.msra.mxu0 %v319
    %337 = vmatpush.msra.mxu0 %v318
    %338 = vmatpush.msra.mxu0 %v317
    %339 = vmatpush.msra.mxu0 %v316
    %340 = vmatpush.msra.mxu0 %v315
    %341 = vmatpush.msra.mxu0 %v314
    %342 = vmatpush.msra.mxu0 %v313
    %343 = vmatpush.msra.mxu0 %v312
    %344 = vmatmul.f32.gmra.mxu0 %v309
    %v345 = vpop.f32.mrf.mxu0
    %v346 = vadd.f32 %v311, %v345
    %347 = vdwg.mxu0
    %v348 = vmax.f32 %v346, 0.0
    %s349 = scalar_lea.vmem %s13, 3
    %v350 = vld [vmem:[%s349] ss:$8 sm:$0x3]
    %v351 = vld [vmem:[#allocation8] sm:$0xff]
    %v352 = vld [vmem:[#allocation8 + $0x8] sm:$0xff]
    %v353 = vld [vmem:[#allocation8 + $0x10] sm:$0xff]
    %v354 = vld [vmem:[#allocation8 + $0x18] sm:$0xff]
    %v355 = vld [vmem:[#allocation8 + $0x20] sm:$0xff]
    %v356 = vld [vmem:[#allocation8 + $0x28] sm:$0xff]
    %v357 = vld [vmem:[#allocation8 + $0x30] sm:$0xff]
    %v358 = vld [vmem:[#allocation8 + $0x38] sm:$0xff]
    %v359 = vld [vmem:[#allocation8 + $0x40] sm:$0xff]
    %v360 = vld [vmem:[#allocation8 + $0x48] sm:$0xff]
    %v361 = vld [vmem:[#allocation8 + $0x50] sm:$0xff]
    %v362 = vld [vmem:[#allocation8 + $0x58] sm:$0xff]
    %v363 = vld [vmem:[#allocation8 + $0x60] sm:$0xff]
    %v364 = vld [vmem:[#allocation8 + $0x68] sm:$0xff]
    %v365 = vld [vmem:[#allocation8 + $0x70] sm:$0xff]
    %v366 = vld [vmem:[#allocation8 + $0x78] sm:$0xff]
    %v367 = vld [vmem:[#allocation8 + $0x80] sm:$0xff]
    %v368 = vld [vmem:[#allocation8 + $0x88] sm:$0xff]
    %v369 = vld [vmem:[#allocation8 + $0x90] sm:$0xff]
    %v370 = vld [vmem:[#allocation8 + $0x98] sm:$0xff]
    %v371 = vld [vmem:[#allocation8 + $0xa0] sm:$0xff]
    %v372 = vld [vmem:[#allocation8 + $0xa8] sm:$0xff]
    %v373 = vld [vmem:[#allocation8 + $0xb0] sm:$0xff]
    %v374 = vld [vmem:[#allocation8 + $0xb8] sm:$0xff]
    %v375 = vld [vmem:[#allocation8 + $0xc0] sm:$0xff]
    %v376 = vld [vmem:[#allocation8 + $0xc8] sm:$0xff]
    %v377 = vld [vmem:[#allocation8 + $0xd0] sm:$0xff]
    %v378 = vld [vmem:[#allocation8 + $0xd8] sm:$0xff]
    %v379 = vld [vmem:[#allocation8 + $0xe0] sm:$0xff]
    %v380 = vld [vmem:[#allocation8 + $0xe8] sm:$0xff]
    %v381 = vld [vmem:[#allocation8 + $0xf0] sm:$0xff]
    %v382 = vld [vmem:[#allocation8 + $0xf8] sm:$0xff]
    %v384 = vperm.slane %v350, 0
    %v385 = vperm.slane %v350, 1
    %388 = vmatpush.msra.mxu0 %v381
    %389 = vmatpush.msra.mxu0 %v379
    %390 = vmatpush.msra.mxu0 %v377
    %391 = vmatpush.msra.mxu0 %v375
    %392 = vmatpush.msra.mxu0 %v373
    %393 = vmatpush.msra.mxu0 %v371
    %394 = vmatpush.msra.mxu0 %v369
    %395 = vmatpush.msra.mxu0 %v367
    %396 = vmatpush.msra.mxu0 %v365
    %397 = vmatpush.msra.mxu0 %v363
    %398 = vmatpush.msra.mxu0 %v361
    %399 = vmatpush.msra.mxu0 %v359
    %400 = vmatpush.msra.mxu0 %v357
    %401 = vmatpush.msra.mxu0 %v355
    %402 = vmatpush.msra.mxu0 %v353
    %403 = vmatpush.msra.mxu0 %v351
    %404 = vmatmul.f32.gmra.mxu0 %v348
    %v405 = vpop.f32.mrf.mxu0
    %v406 = vadd.f32 %v384, %v405
    %407 = vdwg.mxu0
    %408 = vmatpush.msra.mxu0 %v382
    %409 = vmatpush.msra.mxu0 %v380
    %410 = vmatpush.msra.mxu0 %v378
    %411 = vmatpush.msra.mxu0 %v376
    %412 = vmatpush.msra.mxu0 %v374
    %413 = vmatpush.msra.mxu0 %v372
    %414 = vmatpush.msra.mxu0 %v370
    %415 = vmatpush.msra.mxu0 %v368
    %416 = vmatpush.msra.mxu0 %v366
    %417 = vmatpush.msra.mxu0 %v364
    %418 = vmatpush.msra.mxu0 %v362
    %419 = vmatpush.msra.mxu0 %v360
    %420 = vmatpush.msra.mxu0 %v358
    %421 = vmatpush.msra.mxu0 %v356
    %422 = vmatpush.msra.mxu0 %v354
    %423 = vmatpush.msra.mxu0 %v352
    %424 = vmatmul.f32.gmra.mxu0 %v348
    %v425 = vpop.f32.mrf.mxu0
    %v426 = vadd.f32 %v385, %v425
    %427 = vdwg.mxu0
    %v428 = vsub.f32 0.0, %v406
    %v429 = vmul.f32 %v428, 1.442695
    %v430 = vpow.pop %v429
    %v431 = vadd.f32 %v430, 1.0
    %v432 = vrcp.pop %v431
    %v433 = vmul.f32 %v431, %v432
    %v434 = vsub.f32 1.0, %v433
    %v435 = vmul.f32 %v432, %v434
    %v436 = vadd.f32 %v432, %v435
    %vm437 = vweird.f32 %v431
    %vm438 = vweird.f32 %v432
    %vm439 = vmor %vm437, %vm438
    %v440 = vsel %vm439, %v432, %v436
    %v441 = vand.u32 2147483647, %v431
    %vm442 = vcmp.eq.f32.partialorder %v441, 8.507059e+37
    %v443 = vand.u32 %v431, 2147483648
    %v444 = vor.u32 1.1754944e-38, %v443
    %v445 = vsel %vm442, %v444, %v440
    %v446 = vmul.f32 1.0, %v445
    %v447 = vmul.f32 %v273, %v446
    %v448 = vadd.f32 %v447, %v426
    %v449 = vadd.f32 %v448, %v273
    %v450 = vmax.f32 %v449, 0.0
    %v451 = vld [vmem:[%s13 + $0x4] ss:$0 sm:$0xff]
    %v452 = vld [vmem:[#allocation10] sm:$0xff]
    %v453 = vld [vmem:[#allocation10 + $0x8] sm:$0xff]
    %v454 = vld [vmem:[#allocation10 + $0x10] sm:$0xff]
    %v455 = vld [vmem:[#allocation10 + $0x18] sm:$0xff]
    %v456 = vld [vmem:[#allocation10 + $0x20] sm:$0xff]
    %v457 = vld [vmem:[#allocation10 + $0x28] sm:$0xff]
    %v458 = vld [vmem:[#allocation10 + $0x30] sm:$0xff]
    %v459 = vld [vmem:[#allocation10 + $0x38] sm:$0xff]
    %v460 = vld [vmem:[#allocation10 + $0x40] sm:$0xff]
    %v461 = vld [vmem:[#allocation10 + $0x48] sm:$0xff]
    %v462 = vld [vmem:[#allocation10 + $0x50] sm:$0xff]
    %v463 = vld [vmem:[#allocation10 + $0x58] sm:$0xff]
    %v464 = vld [vmem:[#allocation10 + $0x60] sm:$0xff]
    %v465 = vld [vmem:[#allocation10 + $0x68] sm:$0xff]
    %v466 = vld [vmem:[#allocation10 + $0x70] sm:$0xff]
    %v467 = vld [vmem:[#allocation10 + $0x78] sm:$0xff]
    %468 = vmatpush.msra.mxu0 %v467
    %469 = vmatpush.msra.mxu0 %v466
    %470 = vmatpush.msra.mxu0 %v465
    %471 = vmatpush.msra.mxu0 %v464
    %472 = vmatpush.msra.mxu0 %v463
    %473 = vmatpush.msra.mxu0 %v462
    %474 = vmatpush.msra.mxu0 %v461
    %475 = vmatpush.msra.mxu0 %v460
    %476 = vmatpush.msra.mxu0 %v459
    %477 = vmatpush.msra.mxu0 %v458
    %478 = vmatpush.msra.mxu0 %v457
    %479 = vmatpush.msra.mxu0 %v456
    %480 = vmatpush.msra.mxu0 %v455
    %481 = vmatpush.msra.mxu0 %v454
    %482 = vmatpush.msra.mxu0 %v453
    %483 = vmatpush.msra.mxu0 %v452
    %484 = vmatmul.f32.gmra.mxu0 %v450
    %v485 = vpop.f32.mrf.mxu0
    %v486 = vadd.f32 %v451, %v485
    %487 = vdwg.mxu0
    %v488 = vld [vmem:[%s13 + $0x5] ss:$0 sm:$0xff]
    %v489 = vld [vmem:[#allocation11] sm:$0xff]
    %v490 = vld [vmem:[#allocation11 + $0x8] sm:$0xff]
    %v491 = vld [vmem:[#allocation11 + $0x10] sm:$0xff]
    %v492 = vld [vmem:[#allocation11 + $0x18] sm:$0xff]
    %v493 = vld [vmem:[#allocation11 + $0x20] sm:$0xff]
    %v494 = vld [vmem:[#allocation11 + $0x28] sm:$0xff]
    %v495 = vld [vmem:[#allocation11 + $0x30] sm:$0xff]
    %v496 = vld [vmem:[#allocation11 + $0x38] sm:$0xff]
    %v497 = vld [vmem:[#allocation11 + $0x40] sm:$0xff]
    %v498 = vld [vmem:[#allocation11 + $0x48] sm:$0xff]
    %v499 = vld [vmem:[#allocation11 + $0x50] sm:$0xff]
    %v500 = vld [vmem:[#allocation11 + $0x58] sm:$0xff]
    %v501 = vld [vmem:[#allocation11 + $0x60] sm:$0xff]
    %v502 = vld [vmem:[#allocation11 + $0x68] sm:$0xff]
    %v503 = vld [vmem:[#allocation11 + $0x70] sm:$0xff]
    %v504 = vld [vmem:[#allocation11 + $0x78] sm:$0xff]
    %505 = vmatpush.msra.mxu0 %v504
    %506 = vmatpush.msra.mxu0 %v503
    %507 = vmatpush.msra.mxu0 %v502
    %508 = vmatpush.msra.mxu0 %v501
    %509 = vmatpush.msra.mxu0 %v500
    %510 = vmatpush.msra.mxu0 %v499
    %511 = vmatpush.msra.mxu0 %v498
    %512 = vmatpush.msra.mxu0 %v497
    %513 = vmatpush.msra.mxu0 %v496
    %514 = vmatpush.msra.mxu0 %v495
    %515 = vmatpush.msra.mxu0 %v494
    %516 = vmatpush.msra.mxu0 %v493
    %517 = vmatpush.msra.mxu0 %v492
    %518 = vmatpush.msra.mxu0 %v491
    %519 = vmatpush.msra.mxu0 %v490
    %520 = vmatpush.msra.mxu0 %v489
    %521 = vmatmul.f32.gmra.mxu0 %v486
    %v522 = vpop.f32.mrf.mxu0
    %v523 = vadd.f32 %v488, %v522
    %524 = vdwg.mxu0
    %v525 = vmax.f32 %v523, 0.0
    %s526 = scalar_lea.vmem %s13, 6
    %v527 = vld [vmem:[%s526] ss:$8 sm:$0x3]
    %v528 = vld [vmem:[#allocation13] sm:$0xff]
    %v529 = vld [vmem:[#allocation13 + $0x8] sm:$0xff]
    %v530 = vld [vmem:[#allocation13 + $0x10] sm:$0xff]
    %v531 = vld [vmem:[#allocation13 + $0x18] sm:$0xff]
    %v532 = vld [vmem:[#allocation13 + $0x20] sm:$0xff]
    %v533 = vld [vmem:[#allocation13 + $0x28] sm:$0xff]
    %v534 = vld [vmem:[#allocation13 + $0x30] sm:$0xff]
    %v535 = vld [vmem:[#allocation13 + $0x38] sm:$0xff]
    %v536 = vld [vmem:[#allocation13 + $0x40] sm:$0xff]
    %v537 = vld [vmem:[#allocation13 + $0x48] sm:$0xff]
    %v538 = vld [vmem:[#allocation13 + $0x50] sm:$0xff]
    %v539 = vld [vmem:[#allocation13 + $0x58] sm:$0xff]
    %v540 = vld [vmem:[#allocation13 + $0x60] sm:$0xff]
    %v541 = vld [vmem:[#allocation13 + $0x68] sm:$0xff]
    %v542 = vld [vmem:[#allocation13 + $0x70] sm:$0xff]
    %v543 = vld [vmem:[#allocation13 + $0x78] sm:$0xff]
    %v544 = vld [vmem:[#allocation13 + $0x80] sm:$0xff]
    %v545 = vld [vmem:[#allocation13 + $0x88] sm:$0xff]
    %v546 = vld [vmem:[#allocation13 + $0x90] sm:$0xff]
    %v547 = vld [vmem:[#allocation13 + $0x98] sm:$0xff]
    %v548 = vld [vmem:[#allocation13 + $0xa0] sm:$0xff]
    %v549 = vld [vmem:[#allocation13 + $0xa8] sm:$0xff]
    %v550 = vld [vmem:[#allocation13 + $0xb0] sm:$0xff]
    %v551 = vld [vmem:[#allocation13 + $0xb8] sm:$0xff]
    %v552 = vld [vmem:[#allocation13 + $0xc0] sm:$0xff]
    %v553 = vld [vmem:[#allocation13 + $0xc8] sm:$0xff]
    %v554 = vld [vmem:[#allocation13 + $0xd0] sm:$0xff]
    %v555 = vld [vmem:[#allocation13 + $0xd8] sm:$0xff]
    %v556 = vld [vmem:[#allocation13 + $0xe0] sm:$0xff]
    %v557 = vld [vmem:[#allocation13 + $0xe8] sm:$0xff]
    %v558 = vld [vmem:[#allocation13 + $0xf0] sm:$0xff]
    %v559 = vld [vmem:[#allocation13 + $0xf8] sm:$0xff]
    %v561 = vperm.slane %v527, 0
    %v562 = vperm.slane %v527, 1
    %565 = vmatpush.msra.mxu0 %v558
    %566 = vmatpush.msra.mxu0 %v556
    %567 = vmatpush.msra.mxu0 %v554
    %568 = vmatpush.msra.mxu0 %v552
    %569 = vmatpush.msra.mxu0 %v550
    %570 = vmatpush.msra.mxu0 %v548
    %571 = vmatpush.msra.mxu0 %v546
    %572 = vmatpush.msra.mxu0 %v544
    %573 = vmatpush.msra.mxu0 %v542
    %574 = vmatpush.msra.mxu0 %v540
    %575 = vmatpush.msra.mxu0 %v538
    %576 = vmatpush.msra.mxu0 %v536
    %577 = vmatpush.msra.mxu0 %v534
    %578 = vmatpush.msra.mxu0 %v532
    %579 = vmatpush.msra.mxu0 %v530
    %580 = vmatpush.msra.mxu0 %v528
    %581 = vmatmul.f32.gmra.mxu0 %v525
    %v582 = vpop.f32.mrf.mxu0
    %v583 = vadd.f32 %v561, %v582
    %584 = vdwg.mxu0
    %585 = vmatpush.msra.mxu0 %v559
    %586 = vmatpush.msra.mxu0 %v557
    %587 = vmatpush.msra.mxu0 %v555
    %588 = vmatpush.msra.mxu0 %v553
    %589 = vmatpush.msra.mxu0 %v551
    %590 = vmatpush.msra.mxu0 %v549
    %591 = vmatpush.msra.mxu0 %v547
    %592 = vmatpush.msra.mxu0 %v545
    %593 = vmatpush.msra.mxu0 %v543
    %594 = vmatpush.msra.mxu0 %v541
    %595 = vmatpush.msra.mxu0 %v539
    %596 = vmatpush.msra.mxu0 %v537
    %597 = vmatpush.msra.mxu0 %v535
    %598 = vmatpush.msra.mxu0 %v533
    %599 = vmatpush.msra.mxu0 %v531
    %600 = vmatpush.msra.mxu0 %v529
    %601 = vmatmul.f32.gmra.mxu0 %v525
    %v602 = vpop.f32.mrf.mxu0
    %v603 = vadd.f32 %v562, %v602
    %604 = vdwg.mxu0
    %v605 = vsub.f32 0.0, %v583
    %v606 = vmul.f32 %v605, 1.442695
    %v607 = vpow.pop %v606
    %v608 = vadd.f32 %v607, 1.0
    %v609 = vrcp.pop %v608
    %v610 = vmul.f32 %v608, %v609
    %v611 = vsub.f32 1.0, %v610
    %v612 = vmul.f32 %v609, %v611
    %v613 = vadd.f32 %v609, %v612
    %vm614 = vweird.f32 %v608
    %vm615 = vweird.f32 %v609
    %vm616 = vmor %vm614, %vm615
    %v617 = vsel %vm616, %v609, %v613
    %v618 = vand.u32 2147483647, %v608
    %vm619 = vcmp.eq.f32.partialorder %v618, 8.507059e+37
    %v620 = vand.u32 %v608, 2147483648
    %v621 = vor.u32 1.1754944e-38, %v620
    %v622 = vsel %vm619, %v621, %v617
    %v623 = vmul.f32 1.0, %v622
    %v624 = vmul.f32 %v450, %v623
    %v625 = vadd.f32 %v624, %v603
    %v626 = vadd.f32 %v625, %v450
    %v627 = vmax.f32 %v626, 0.0
    %v628 = vld [vmem:[%s13 + $0x7] ss:$0 sm:$0xff]
    %v629 = vld [vmem:[#allocation14] sm:$0xff]
    %v630 = vld [vmem:[#allocation14 + $0x8] sm:$0xff]
    %v631 = vld [vmem:[#allocation14 + $0x10] sm:$0xff]
    %v632 = vld [vmem:[#allocation14 + $0x18] sm:$0xff]
    %v633 = vld [vmem:[#allocation14 + $0x20] sm:$0xff]
    %v634 = vld [vmem:[#allocation14 + $0x28] sm:$0xff]
    %v635 = vld [vmem:[#allocation14 + $0x30] sm:$0xff]
    %v636 = vld [vmem:[#allocation14 + $0x38] sm:$0xff]
    %v637 = vld [vmem:[#allocation14 + $0x40] sm:$0xff]
    %v638 = vld [vmem:[#allocation14 + $0x48] sm:$0xff]
    %v639 = vld [vmem:[#allocation14 + $0x50] sm:$0xff]
    %v640 = vld [vmem:[#allocation14 + $0x58] sm:$0xff]
    %v641 = vld [vmem:[#allocation14 + $0x60] sm:$0xff]
    %v642 = vld [vmem:[#allocation14 + $0x68] sm:$0xff]
    %v643 = vld [vmem:[#allocation14 + $0x70] sm:$0xff]
    %v644 = vld [vmem:[#allocation14 + $0x78] sm:$0xff]
    %645 = vmatpush.msra.mxu0 %v644
    %646 = vmatpush.msra.mxu0 %v643
    %647 = vmatpush.msra.mxu0 %v642
    %648 = vmatpush.msra.mxu0 %v641
    %649 = vmatpush.msra.mxu0 %v640
    %650 = vmatpush.msra.mxu0 %v639
    %651 = vmatpush.msra.mxu0 %v638
    %652 = vmatpush.msra.mxu0 %v637
    %653 = vmatpush.msra.mxu0 %v636
    %654 = vmatpush.msra.mxu0 %v635
    %655 = vmatpush.msra.mxu0 %v634
    %656 = vmatpush.msra.mxu0 %v633
    %657 = vmatpush.msra.mxu0 %v632
    %658 = vmatpush.msra.mxu0 %v631
    %659 = vmatpush.msra.mxu0 %v630
    %660 = vmatpush.msra.mxu0 %v629
    %661 = vmatmul.f32.gmra.mxu0 %v627
    %v662 = vpop.f32.mrf.mxu0
    %v663 = vadd.f32 %v628, %v662
    %664 = vdwg.mxu0
    %v665 = vld [vmem:[%s13 + $0x10] ss:$0 sm:$0xff]
    %v666 = vld [vmem:[#allocation16] sm:$0xff]
    %v667 = vld [vmem:[#allocation16 + $0x8] sm:$0xff]
    %v668 = vld [vmem:[#allocation16 + $0x10] sm:$0xff]
    %v669 = vld [vmem:[#allocation16 + $0x18] sm:$0xff]
    %v670 = vld [vmem:[#allocation16 + $0x20] sm:$0xff]
    %v671 = vld [vmem:[#allocation16 + $0x28] sm:$0xff]
    %v672 = vld [vmem:[#allocation16 + $0x30] sm:$0xff]
    %v673 = vld [vmem:[#allocation16 + $0x38] sm:$0xff]
    %v674 = vld [vmem:[#allocation16 + $0x40] sm:$0xff]
    %v675 = vld [vmem:[#allocation16 + $0x48] sm:$0xff]
    %v676 = vld [vmem:[#allocation16 + $0x50] sm:$0xff]
    %v677 = vld [vmem:[#allocation16 + $0x58] sm:$0xff]
    %v678 = vld [vmem:[#allocation16 + $0x60] sm:$0xff]
    %v679 = vld [vmem:[#allocation16 + $0x68] sm:$0xff]
    %v680 = vld [vmem:[#allocation16 + $0x70] sm:$0xff]
    %v681 = vld [vmem:[#allocation16 + $0x78] sm:$0xff]
    %682 = vmatpush.msra.mxu0 %v681
    %683 = vmatpush.msra.mxu0 %v680
    %684 = vmatpush.msra.mxu0 %v679
    %685 = vmatpush.msra.mxu0 %v678
    %686 = vmatpush.msra.mxu0 %v677
    %687 = vmatpush.msra.mxu0 %v676
    %688 = vmatpush.msra.mxu0 %v675
    %689 = vmatpush.msra.mxu0 %v674
    %690 = vmatpush.msra.mxu0 %v673
    %691 = vmatpush.msra.mxu0 %v672
    %692 = vmatpush.msra.mxu0 %v671
    %693 = vmatpush.msra.mxu0 %v670
    %694 = vmatpush.msra.mxu0 %v669
    %695 = vmatpush.msra.mxu0 %v668
    %696 = vmatpush.msra.mxu0 %v667
    %697 = vmatpush.msra.mxu0 %v666
    %698 = vmatmul.f32.gmra.mxu0 %v663
    %v699 = vpop.f32.mrf.mxu0
    %v700 = vadd.f32 %v665, %v699
    %701 = vdwg.mxu0
    %v702 = vmax.f32 %v700, 0.0
    %s703 = scalar_lea.vmem %s13, 17
    %v704 = vld [vmem:[%s703] ss:$8 sm:$0x3]
    %v705 = vld [vmem:[#allocation17] sm:$0xff]
    %v706 = vld [vmem:[#allocation17 + $0x8] sm:$0xff]
    %v707 = vld [vmem:[#allocation17 + $0x10] sm:$0xff]
    %v708 = vld [vmem:[#allocation17 + $0x18] sm:$0xff]
    %v709 = vld [vmem:[#allocation17 + $0x20] sm:$0xff]
    %v710 = vld [vmem:[#allocation17 + $0x28] sm:$0xff]
    %v711 = vld [vmem:[#allocation17 + $0x30] sm:$0xff]
    %v712 = vld [vmem:[#allocation17 + $0x38] sm:$0xff]
    %v713 = vld [vmem:[#allocation17 + $0x40] sm:$0xff]
    %v714 = vld [vmem:[#allocation17 + $0x48] sm:$0xff]
    %v715 = vld [vmem:[#allocation17 + $0x50] sm:$0xff]
    %v716 = vld [vmem:[#allocation17 + $0x58] sm:$0xff]
    %v717 = vld [vmem:[#allocation17 + $0x60] sm:$0xff]
    %v718 = vld [vmem:[#allocation17 + $0x68] sm:$0xff]
    %v719 = vld [vmem:[#allocation17 + $0x70] sm:$0xff]
    %v720 = vld [vmem:[#allocation17 + $0x78] sm:$0xff]
    %v721 = vld [vmem:[#allocation17 + $0x80] sm:$0xff]
    %v722 = vld [vmem:[#allocation17 + $0x88] sm:$0xff]
    %v723 = vld [vmem:[#allocation17 + $0x90] sm:$0xff]
    %v724 = vld [vmem:[#allocation17 + $0x98] sm:$0xff]
    %v725 = vld [vmem:[#allocation17 + $0xa0] sm:$0xff]
    %v726 = vld [vmem:[#allocation17 + $0xa8] sm:$0xff]
    %v727 = vld [vmem:[#allocation17 + $0xb0] sm:$0xff]
    %v728 = vld [vmem:[#allocation17 + $0xb8] sm:$0xff]
    %v729 = vld [vmem:[#allocation17 + $0xc0] sm:$0xff]
    %v730 = vld [vmem:[#allocation17 + $0xc8] sm:$0xff]
    %v731 = vld [vmem:[#allocation17 + $0xd0] sm:$0xff]
    %v732 = vld [vmem:[#allocation17 + $0xd8] sm:$0xff]
    %v733 = vld [vmem:[#allocation17 + $0xe0] sm:$0xff]
    %v734 = vld [vmem:[#allocation17 + $0xe8] sm:$0xff]
    %v735 = vld [vmem:[#allocation17 + $0xf0] sm:$0xff]
    %v736 = vld [vmem:[#allocation17 + $0xf8] sm:$0xff]
    %v738 = vperm.slane %v704, 0
    %v739 = vperm.slane %v704, 1
    %742 = vmatpush.msra.mxu0 %v735
    %743 = vmatpush.msra.mxu0 %v733
    %744 = vmatpush.msra.mxu0 %v731
    %745 = vmatpush.msra.mxu0 %v729
    %746 = vmatpush.msra.mxu0 %v727
    %747 = vmatpush.msra.mxu0 %v725
    %748 = vmatpush.msra.mxu0 %v723
    %749 = vmatpush.msra.mxu0 %v721
    %750 = vmatpush.msra.mxu0 %v719
    %751 = vmatpush.msra.mxu0 %v717
    %752 = vmatpush.msra.mxu0 %v715
    %753 = vmatpush.msra.mxu0 %v713
    %754 = vmatpush.msra.mxu0 %v711
    %755 = vmatpush.msra.mxu0 %v709
    %756 = vmatpush.msra.mxu0 %v707
    %757 = vmatpush.msra.mxu0 %v705
    %758 = vmatmul.f32.gmra.mxu0 %v702
    %v759 = vpop.f32.mrf.mxu0
    %v760 = vadd.f32 %v738, %v759
    %761 = vdwg.mxu0
    %762 = vmatpush.msra.mxu0 %v736
    %763 = vmatpush.msra.mxu0 %v734
    %764 = vmatpush.msra.mxu0 %v732
    %765 = vmatpush.msra.mxu0 %v730
    %766 = vmatpush.msra.mxu0 %v728
    %767 = vmatpush.msra.mxu0 %v726
    %768 = vmatpush.msra.mxu0 %v724
    %769 = vmatpush.msra.mxu0 %v722
    %770 = vmatpush.msra.mxu0 %v720
    %771 = vmatpush.msra.mxu0 %v718
    %772 = vmatpush.msra.mxu0 %v716
    %773 = vmatpush.msra.mxu0 %v714
    %774 = vmatpush.msra.mxu0 %v712
    %775 = vmatpush.msra.mxu0 %v710
    %776 = vmatpush.msra.mxu0 %v708
    %777 = vmatpush.msra.mxu0 %v706
    %778 = vmatmul.f32.gmra.mxu0 %v702
    %v779 = vpop.f32.mrf.mxu0
    %v780 = vadd.f32 %v739, %v779
    %781 = vdwg.mxu0
    %v782 = vsub.f32 0.0, %v760
    %v783 = vmul.f32 %v782, 1.442695
    %v784 = vpow.pop %v783
    %v785 = vadd.f32 %v784, 1.0
    %v786 = vrcp.pop %v785
    %v787 = vmul.f32 %v785, %v786
    %v788 = vsub.f32 1.0, %v787
    %v789 = vmul.f32 %v786, %v788
    %v790 = vadd.f32 %v786, %v789
    %vm791 = vweird.f32 %v785
    %vm792 = vweird.f32 %v786
    %vm793 = vmor %vm791, %vm792
    %v794 = vsel %vm793, %v786, %v790
    %v795 = vand.u32 2147483647, %v785
    %vm796 = vcmp.eq.f32.partialorder %v795, 8.507059e+37
    %v797 = vand.u32 %v785, 2147483648
    %v798 = vor.u32 1.1754944e-38, %v797
    %v799 = vsel %vm796, %v798, %v794
    %v800 = vmul.f32 1.0, %v799
    %v801 = vmul.f32 %v627, %v800
    %v802 = vadd.f32 %v801, %v780
    %v803 = vadd.f32 %v802, %v627
    %v804 = vmax.f32 %v803, 0.0
    %v805 = vld [vmem:[%s13 + $0x12] ss:$0 sm:$0xff]
    %v806 = vld [vmem:[#allocation19] sm:$0xff]
    %v807 = vld [vmem:[#allocation19 + $0x8] sm:$0xff]
    %v808 = vld [vmem:[#allocation19 + $0x10] sm:$0xff]
    %v809 = vld [vmem:[#allocation19 + $0x18] sm:$0xff]
    %v810 = vld [vmem:[#allocation19 + $0x20] sm:$0xff]
    %v811 = vld [vmem:[#allocation19 + $0x28] sm:$0xff]
    %v812 = vld [vmem:[#allocation19 + $0x30] sm:$0xff]
    %v813 = vld [vmem:[#allocation19 + $0x38] sm:$0xff]
    %v814 = vld [vmem:[#allocation19 + $0x40] sm:$0xff]
    %v815 = vld [vmem:[#allocation19 + $0x48] sm:$0xff]
    %v816 = vld [vmem:[#allocation19 + $0x50] sm:$0xff]
    %v817 = vld [vmem:[#allocation19 + $0x58] sm:$0xff]
    %v818 = vld [vmem:[#allocation19 + $0x60] sm:$0xff]
    %v819 = vld [vmem:[#allocation19 + $0x68] sm:$0xff]
    %v820 = vld [vmem:[#allocation19 + $0x70] sm:$0xff]
    %v821 = vld [vmem:[#allocation19 + $0x78] sm:$0xff]
    %822 = vmatpush.msra.mxu0 %v821
    %823 = vmatpush.msra.mxu0 %v820
    %824 = vmatpush.msra.mxu0 %v819
    %825 = vmatpush.msra.mxu0 %v818
    %826 = vmatpush.msra.mxu0 %v817
    %827 = vmatpush.msra.mxu0 %v816
    %828 = vmatpush.msra.mxu0 %v815
    %829 = vmatpush.msra.mxu0 %v814
    %830 = vmatpush.msra.mxu0 %v813
    %831 = vmatpush.msra.mxu0 %v812
    %832 = vmatpush.msra.mxu0 %v811
    %833 = vmatpush.msra.mxu0 %v810
    %834 = vmatpush.msra.mxu0 %v809
    %835 = vmatpush.msra.mxu0 %v808
    %836 = vmatpush.msra.mxu0 %v807
    %837 = vmatpush.msra.mxu0 %v806
    %838 = vmatmul.f32.gmra.mxu0 %v804
    %v839 = vpop.f32.mrf.mxu0
    %v840 = vadd.f32 %v805, %v839
    %841 = vdwg.mxu0
    %v842 = vmax.f32 %v840, 0.0
    %v843 = vld [vmem:[%s13 + $0x13] ss:$0 sm:$0xff]
    %v844 = vld [vmem:[#allocation20] sm:$0xff]
    %v845 = vld [vmem:[#allocation20 + $0x8] sm:$0xff]
    %v846 = vld [vmem:[#allocation20 + $0x10] sm:$0xff]
    %v847 = vld [vmem:[#allocation20 + $0x18] sm:$0xff]
    %v848 = vld [vmem:[#allocation20 + $0x20] sm:$0xff]
    %v849 = vld [vmem:[#allocation20 + $0x28] sm:$0xff]
    %v850 = vld [vmem:[#allocation20 + $0x30] sm:$0xff]
    %v851 = vld [vmem:[#allocation20 + $0x38] sm:$0xff]
    %v852 = vld [vmem:[#allocation20 + $0x40] sm:$0xff]
    %v853 = vld [vmem:[#allocation20 + $0x48] sm:$0xff]
    %v854 = vld [vmem:[#allocation20 + $0x50] sm:$0xff]
    %v855 = vld [vmem:[#allocation20 + $0x58] sm:$0xff]
    %v856 = vld [vmem:[#allocation20 + $0x60] sm:$0xff]
    %v857 = vld [vmem:[#allocation20 + $0x68] sm:$0xff]
    %v858 = vld [vmem:[#allocation20 + $0x70] sm:$0xff]
    %v859 = vld [vmem:[#allocation20 + $0x78] sm:$0xff]
    %860 = vmatpush.msra.mxu0 %v859
    %861 = vmatpush.msra.mxu0 %v858
    %862 = vmatpush.msra.mxu0 %v857
    %863 = vmatpush.msra.mxu0 %v856
    %864 = vmatpush.msra.mxu0 %v855
    %865 = vmatpush.msra.mxu0 %v854
    %866 = vmatpush.msra.mxu0 %v853
    %867 = vmatpush.msra.mxu0 %v852
    %868 = vmatpush.msra.mxu0 %v851
    %869 = vmatpush.msra.mxu0 %v850
    %870 = vmatpush.msra.mxu0 %v849
    %871 = vmatpush.msra.mxu0 %v848
    %872 = vmatpush.msra.mxu0 %v847
    %873 = vmatpush.msra.mxu0 %v846
    %874 = vmatpush.msra.mxu0 %v845
    %875 = vmatpush.msra.mxu0 %v844
    %876 = vmatmul.f32.gmra.mxu0 %v842
    %v877 = vpop.f32.mrf.mxu0
    %v878 = vadd.f32 %v843, %v877
    %879 = vdwg.mxu0
    %880 = vadd.xlane.f32.xlu0 %v878
    %v881 = vpop.xlane.xlu0 %880
    %v882 = vmul.f32 %v881, 0.1
    %v883 = vld [vmem:[%s13 + $0x14] ss:$0 sm:$0xff]
    %v884 = vld [vmem:[%s13 + $0x15] ss:$0 sm:$0xff]
    %v885 = vmul.f32 %v842, %v883
    %886 = vadd.xlane.f32.xlu0 %v885
    %v887 = vpop.xlane.xlu0 %886
    %v888 = vadd.f32 %v887, %v884
    %v889 = vsub.f32 %v878, %v882
    %891 = vset.pattern.permute.xlu0 0
    %892 = vperm.xlu0 %891, %v888
    %v893 = vpop.permute.xlu0 %892
    %v895 = vadd.f32 %v889, %v893
    %896 = vst [vmem:[#allocation22] sm:$0xff] %v895
    // Predicated region
    $region106: #{state_action_forward.1} parent=1 // pred_check
      _
    $region107: #{state_action_forward.1} parent=1 // pred_check_branch
      %898 = sbr.rel (0) target = $region109
    $region108: #{state_action_forward.1} parent=1 // pred_region
      %900 = vsyncadd [#allocation4], 0
      %s902 = sshll.u32 [#allocation22], 4
      %s903 = int_to_ptr.vmem [resolvable:$true] %s902
      %s904 = sshll.u32 %s14, 4
      %s905 = int_to_ptr.hbm [resolvable:$true] %s904
      %907 = dma.vmem_to_hbm [thread:$0]  %s903, 128, %s905, [#allocation4]
    $region109: #{state_action_forward.1} parent=1 // pred_fallthru
      _
    // Predicated region
    $region110: #{state_action_forward.1} parent=1 // pred_check
      _
    $region111: #{state_action_forward.1} parent=1 // pred_check_branch
      %909 = sbr.rel (0) target = $region113
    $region112: #{state_action_forward.1} parent=1 // pred_region
      %911 = dma.done [#allocation4], 128
    $region113: #{state_action_forward.1} parent=1 // pred_fallthru
      _
    %912 = vsyncpa [#allocation3], 1
    %913 = vsyncpa [#allocation6], 1
    %914 = vsyncpa [#allocation9], 1
    %915 = vsyncpa [#allocation12], 1
    %916 = vsyncpa [#allocation15], 1
    %917 = vsyncpa [#allocation18], 1
    %918 = vsyncpa [#allocation21], 1
    %919 = vsyncpa [#allocation4], 1

// kernel: state_action_forward.1
$region0: #{state_action_forward.1}
  #allocation0 [shape = 'u32[]', space=smem, size = 0x4, offset = 0x4, fixed_abs, tag = 'smem constant byte address 0x4 - core index']
  #allocation1 [shape = 'u32[72,128]{1,0:T(1,128)}', space=vmem, size = 0x9000, scoped, tag = 'internal scratch']
  %s0 = inlined_call_operand.vmem [shape: f32[8,128], index: 0, kind: input, shape index: {}]
  %s1 = inlined_call_operand.hbm [shape: f32[128,128], index: 1, kind: input, shape index: {}]
  %s2 = inlined_call_operand.hbm [shape: f32[128,128], index: 2, kind: input, shape index: {}]
  %s3 = inlined_call_operand.hbm [shape: f32[128,128], index: 3, kind: input, shape index: {}]
  %s4 = inlined_call_operand.hbm [shape: f32[128,256], index: 4, kind: input, shape index: {}]
  %s5 = inlined_call_operand.hbm [shape: f32[128,128], index: 5, kind: input, shape index: {}]
  %s6 = inlined_call_operand.hbm [shape: f32[128,128], index: 6, kind: input, shape index: {}]
  %s7 = inlined_call_operand.hbm [shape: f32[128,256], index: 7, kind: input, shape index: {}]
  %s8 = inlined_call_operand.hbm [shape: f32[128,128], index: 8, kind: input, shape index: {}]
  %s9 = inlined_call_operand.hbm [shape: f32[128,128], index: 9, kind: input, shape index: {}]
  %s10 = inlined_call_operand.hbm [shape: f32[128,256], index: 10, kind: input, shape index: {}]
  %s11 = inlined_call_operand.hbm [shape: f32[128,128], index: 11, kind: input, shape index: {}]
  %s12 = inlined_call_operand.hbm [shape: f32[128,128], index: 12, kind: input, shape index: {}]
  %s13 = inlined_call_operand.vmem [shape: f32[14,256], index: 13, kind: input, shape index: {}]
  %s14 = inlined_call_operand.hbm [shape: f32[8,128], index: 14, kind: output, shape index: {}]
  %s15 = sld [smem:[#allocation0]]
  $region114: #{state_action_forward.1} parent=0
    _
  %s17 = ssub.s32 1, %s15
  %s18 = scalar_select 0, %s17, %s15
  $region1: #{state_action_forward.1} parent=0
    #allocation2 [shape = 'u8[65536]{0}', space=vmem, size = 0x10000, scoped, tag = 'input window, operand 1, single buffered']
    #allocation3 [shape = 's32[1]{0}', space=sflag, size = 0x4, scoped, tag = 'scoped memory for state_action_forward.1']
    #allocation4 [shape = 's32[1]{0}', space=sflag, size = 0x4, scoped, tag = 'scoped memory for state_action_forward.1']
    #allocation5 [shape = 'u8[65536]{0}', space=vmem, size = 0x10000, scoped, tag = 'input window, operand 2, single buffered']
    #allocation6 [shape = 's32[1]{0}', space=sflag, size = 0x4, scoped, tag = 'scoped memory for state_action_forward.1']
    #allocation7 [shape = 'u8[65536]{0}', space=vmem, size = 0x10000, scoped, tag = 'input window, operand 3, single buffered']
    #allocation8 [shape = 'u8[131072]{0}', space=vmem, size = 0x20000, scoped, tag = 'input window, operand 4, single buffered']
    #allocation9 [shape = 's32[1]{0}', space=sflag, size = 0x4, scoped, tag = 'scoped memory for state_action_forward.1']
    #allocation10 [shape = 'u8[65536]{0}', space=vmem, size = 0x10000, scoped, tag = 'input window, operand 5, single buffered']
    #allocation11 [shape = 'u8[65536]{0}', space=vmem, size = 0x10000, scoped, tag = 'input window, operand 6, single buffered']
    #allocation12 [shape = 's32[1]{0}', space=sflag, size = 0x4, scoped, tag = 'scoped memory for state_action_forward.1']
    #allocation13 [shape = 'u8[131072]{0}', space=vmem, size = 0x20000, scoped, tag = 'input window, operand 7, single buffered']
    #allocation14 [shape = 'u8[65536]{0}', space=vmem, size = 0x10000, scoped, tag = 'input window, operand 8, single buffered']
    #allocation15 [shape = 's32[1]{0}', space=sflag, size = 0x4, scoped, tag = 'scoped memory for state_action_forward.1']
    #allocation16 [shape = 'u8[65536]{0}', space=vmem, size = 0x10000, scoped, tag = 'input window, operand 9, single buffered']
    #allocation17 [shape = 'u8[131072]{0}', space=vmem, size = 0x20000, scoped, tag = 'input window, operand 10, single buffered']
    #allocation18 [shape = 's32[1]{0}', space=sflag, size = 0x4, scoped, tag = 'scoped memory for state_action_forward.1']
    #allocation19 [shape = 'u8[65536]{0}', space=vmem, size = 0x10000, scoped, tag = 'input window, operand 11, single buffered']
    #allocation20 [shape = 'u8[65536]{0}', space=vmem, size = 0x10000, scoped, tag = 'input window, operand 12, single buffered']
    #allocation21 [shape = 's32[1]{0}', space=sflag, size = 0x4, scoped, tag = 'scoped memory for state_action_forward.1']
    #allocation22 [shape = 'u8[4096]{0}', space=vmem, size = 0x1000, scoped, tag = 'output window, operand 0, single buffered']
    %19 = vsyncpa [#allocation3], 0
    %20 = vsyncpa [#allocation6], 0
    %21 = vsyncpa [#allocation9], 0
    %22 = vsyncpa [#allocation12], 0
    %23 = vsyncpa [#allocation15], 0
    %24 = vsyncpa [#allocation18], 0
    %25 = vsyncpa [#allocation21], 0
    %26 = vsyncpa [#allocation4], 0
    // Predicated region
    $region2: #{state_action_forward.1} parent=1 // pred_check
      _
    $region3: #{state_action_forward.1} parent=1 // pred_check_branch
      %28 = sbr.rel (0) target = $region5
    $region4: #{state_action_forward.1} parent=1 // pred_region
      _
    $region5: #{state_action_forward.1} parent=1 // pred_fallthru
      _
    // Predicated region
    $region6: #{state_action_forward.1} parent=1 // pred_check
      _
    $region7: #{state_action_forward.1} parent=1 // pred_check_branch
      %30 = sbr.rel (0) target = $region9
    $region8: #{state_action_forward.1} parent=1 // pred_region
      %32 = vsyncadd [#allocation3], 0
      %s33 = sshll.u32 %s1, 4
      %s34 = int_to_ptr.hbm [resolvable:$true] %s33
      %s35 = sshll.u32 [#allocation2], 4
      %s36 = int_to_ptr.vmem [resolvable:$true] %s35
      %41 = dma.hbm_to_vmem [thread:$0]  %s34, 2048, %s36, [#allocation3], 128, 128, 8
    $region9: #{state_action_forward.1} parent=1 // pred_fallthru
      _
    // Predicated region
    $region10: #{state_action_forward.1} parent=1 // pred_check
      _
    $region11: #{state_action_forward.1} parent=1 // pred_check_branch
      %43 = sbr.rel (0) target = $region13
    $region12: #{state_action_forward.1} parent=1 // pred_region
      %45 = vsyncadd [#allocation6], 0
      %s46 = sshll.u32 %s2, 4
      %s47 = int_to_ptr.hbm [resolvable:$true] %s46
      %s48 = sshll.u32 [#allocation5], 4
      %s49 = int_to_ptr.vmem [resolvable:$true] %s48
      %54 = dma.hbm_to_vmem [thread:$0]  %s47, 2048, %s49, [#allocation6], 128, 128, 8
    $region13: #{state_action_forward.1} parent=1 // pred_fallthru
      _
    // Predicated region
    $region14: #{state_action_forward.1} parent=1 // pred_check
      _
    $region15: #{state_action_forward.1} parent=1 // pred_check_branch
      %56 = sbr.rel (0) target = $region17
    $region16: #{state_action_forward.1} parent=1 // pred_region
      %58 = vsyncadd [#allocation6], 0
      %s59 = sshll.u32 %s3, 4
      %s60 = int_to_ptr.hbm [resolvable:$true] %s59
      %s61 = sshll.u32 [#allocation7], 4
      %s62 = int_to_ptr.vmem [resolvable:$true] %s61
      %67 = dma.hbm_to_vmem [thread:$0]  %s60, 2048, %s62, [#allocation6], 128, 128, 8
    $region17: #{state_action_forward.1} parent=1 // pred_fallthru
      _
    // Predicated region
    $region18: #{state_action_forward.1} parent=1 // pred_check
      _
    $region19: #{state_action_forward.1} parent=1 // pred_check_branch
      %69 = sbr.rel (0) target = $region21
    $region20: #{state_action_forward.1} parent=1 // pred_region
      %71 = vsyncadd [#allocation9], 0
      %s72 = sshll.u32 %s4, 4
      %s73 = int_to_ptr.hbm [resolvable:$true] %s72
      %s74 = sshll.u32 [#allocation8], 4
      %s75 = int_to_ptr.vmem [resolvable:$true] %s74
      %80 = dma.hbm_to_vmem [thread:$0]  %s73, 4096, %s75, [#allocation9], 256, 256, 16
    $region21: #{state_action_forward.1} parent=1 // pred_fallthru
      _
    // Predicated region
    $region22: #{state_action_forward.1} parent=1 // pred_check
      _
    $region23: #{state_action_forward.1} parent=1 // pred_check_branch
      %82 = sbr.rel (0) target = $region25
    $region24: #{state_action_forward.1} parent=1 // pred_region
      %84 = vsyncadd [#allocation9], 0
      %s85 = sshll.u32 %s5, 4
      %s86 = int_to_ptr.hbm [resolvable:$true] %s85
      %s87 = sshll.u32 [#allocation10], 4
      %s88 = int_to_ptr.vmem [resolvable:$true] %s87
      %93 = dma.hbm_to_vmem [thread:$0]  %s86, 2048, %s88, [#allocation9], 128, 128, 8
    $region25: #{state_action_forward.1} parent=1 // pred_fallthru
      _
    // Predicated region
    $region26: #{state_action_forward.1} parent=1 // pred_check
      _
    $region27: #{state_action_forward.1} parent=1 // pred_check_branch
      %95 = sbr.rel (0) target = $region29
    $region28: #{state_action_forward.1} parent=1 // pred_region
      %97 = vsyncadd [#allocation12], 0
      %s98 = sshll.u32 %s6, 4
      %s99 = int_to_ptr.hbm [resolvable:$true] %s98
      %s100 = sshll.u32 [#allocation11], 4
      %s101 = int_to_ptr.vmem [resolvable:$true] %s100
      %106 = dma.hbm_to_vmem [thread:$0]  %s99, 2048, %s101, [#allocation12], 128, 128, 8
    $region29: #{state_action_forward.1} parent=1 // pred_fallthru
      _
    // Predicated region
    $region30: #{state_action_forward.1} parent=1 // pred_check
      _
    $region31: #{state_action_forward.1} parent=1 // pred_check_branch
      %108 = sbr.rel (0) target = $region33
    $region32: #{state_action_forward.1} parent=1 // pred_region
      %110 = vsyncadd [#allocation12], 0
      %s111 = sshll.u32 %s7, 4
      %s112 = int_to_ptr.hbm [resolvable:$true] %s111
      %s113 = sshll.u32 [#allocation13], 4
      %s114 = int_to_ptr.vmem [resolvable:$true] %s113
      %119 = dma.hbm_to_vmem [thread:$0]  %s112, 4096, %s114, [#allocation12], 256, 256, 16
    $region33: #{state_action_forward.1} parent=1 // pred_fallthru
      _
    // Predicated region
    $region34: #{state_action_forward.1} parent=1 // pred_check
      _
    $region35: #{state_action_forward.1} parent=1 // pred_check_branch
      %121 = sbr.rel (0) target = $region37
    $region36: #{state_action_forward.1} parent=1 // pred_region
      %123 = vsyncadd [#allocation15], 0
      %s124 = sshll.u32 %s8, 4
      %s125 = int_to_ptr.hbm [resolvable:$true] %s124
      %s126 = sshll.u32 [#allocation14], 4
      %s127 = int_to_ptr.vmem [resolvable:$true] %s126
      %132 = dma.hbm_to_vmem [thread:$0]  %s125, 2048, %s127, [#allocation15], 128, 128, 8
    $region37: #{state_action_forward.1} parent=1 // pred_fallthru
      _
    // Predicated region
    $region38: #{state_action_forward.1} parent=1 // pred_check
      _
    $region39: #{state_action_forward.1} parent=1 // pred_check_branch
      %134 = sbr.rel (0) target = $region41
    $region40: #{state_action_forward.1} parent=1 // pred_region
      %136 = vsyncadd [#allocation15], 0
      %s137 = sshll.u32 %s9, 4
      %s138 = int_to_ptr.hbm [resolvable:$true] %s137
      %s139 = sshll.u32 [#allocation16], 4
      %s140 = int_to_ptr.vmem [resolvable:$true] %s139
      %145 = dma.hbm_to_vmem [thread:$0]  %s138, 2048, %s140, [#allocation15], 128, 128, 8
    $region41: #{state_action_forward.1} parent=1 // pred_fallthru
      _
    // Predicated region
    $region42: #{state_action_forward.1} parent=1 // pred_check
      _
    $region43: #{state_action_forward.1} parent=1 // pred_check_branch
      %147 = sbr.rel (0) target = $region45
    $region44: #{state_action_forward.1} parent=1 // pred_region
      %149 = vsyncadd [#allocation18], 0
      %s150 = sshll.u32 %s10, 4
      %s151 = int_to_ptr.hbm [resolvable:$true] %s150
      %s152 = sshll.u32 [#allocation17], 4
      %s153 = int_to_ptr.vmem [resolvable:$true] %s152
      %158 = dma.hbm_to_vmem [thread:$0]  %s151, 4096, %s153, [#allocation18], 256, 256, 16
    $region45: #{state_action_forward.1} parent=1 // pred_fallthru
      _
    // Predicated region
    $region46: #{state_action_forward.1} parent=1 // pred_check
      _
    $region47: #{state_action_forward.1} parent=1 // pred_check_branch
      %160 = sbr.rel (0) target = $region49
    $region48: #{state_action_forward.1} parent=1 // pred_region
      %162 = vsyncadd [#allocation18], 0
      %s163 = sshll.u32 %s11, 4
      %s164 = int_to_ptr.hbm [resolvable:$true] %s163
      %s165 = sshll.u32 [#allocation19], 4
      %s166 = int_to_ptr.vmem [resolvable:$true] %s165
      %171 = dma.hbm_to_vmem [thread:$0]  %s164, 2048, %s166, [#allocation18], 128, 128, 8
    $region49: #{state_action_forward.1} parent=1 // pred_fallthru
      _
    // Predicated region
    $region50: #{state_action_forward.1} parent=1 // pred_check
      _
    $region51: #{state_action_forward.1} parent=1 // pred_check_branch
      %173 = sbr.rel (0) target = $region53
    $region52: #{state_action_forward.1} parent=1 // pred_region
      %175 = vsyncadd [#allocation21], 0
      %s176 = sshll.u32 %s12, 4
      %s177 = int_to_ptr.hbm [resolvable:$true] %s176
      %s178 = sshll.u32 [#allocation20], 4
      %s179 = int_to_ptr.vmem [resolvable:$true] %s178
      %184 = dma.hbm_to_vmem [thread:$0]  %s177, 2048, %s179, [#allocation21], 128, 128, 8
    $region53: #{state_action_forward.1} parent=1 // pred_fallthru
      _
    // Predicated region
    $region54: #{state_action_forward.1} parent=1 // pred_check
      _
    $region55: #{state_action_forward.1} parent=1 // pred_check_branch
      %186 = sbr.rel (0) target = $region57
    $region56: #{state_action_forward.1} parent=1 // pred_region
      _
    $region57: #{state_action_forward.1} parent=1 // pred_fallthru
      _
    // Predicated region
    $region58: #{state_action_forward.1} parent=1 // pred_check
      _
    $region59: #{state_action_forward.1} parent=1 // pred_check_branch
      %188 = sbr.rel (0) target = $region61
    $region60: #{state_action_forward.1} parent=1 // pred_region
      %190 = dma.done [#allocation3], 2048
    $region61: #{state_action_forward.1} parent=1 // pred_fallthru
      _
    // Predicated region
    $region62: #{state_action_forward.1} parent=1 // pred_check
      _
    $region63: #{state_action_forward.1} parent=1 // pred_check_branch
      %192 = sbr.rel (0) target = $region65
    $region64: #{state_action_forward.1} parent=1 // pred_region
      %194 = dma.done [#allocation6], 2048
    $region65: #{state_action_forward.1} parent=1 // pred_fallthru
      _
    // Predicated region
    $region66: #{state_action_forward.1} parent=1 // pred_check
      _
    $region67: #{state_action_forward.1} parent=1 // pred_check_branch
      %196 = sbr.rel (0) target = $region69
    $region68: #{state_action_forward.1} parent=1 // pred_region
      %198 = dma.done [#allocation6], 2048
    $region69: #{state_action_forward.1} parent=1 // pred_fallthru
      _
    // Predicated region
    $region70: #{state_action_forward.1} parent=1 // pred_check
      _
    $region71: #{state_action_forward.1} parent=1 // pred_check_branch
      %200 = sbr.rel (0) target = $region73
    $region72: #{state_action_forward.1} parent=1 // pred_region
      %202 = dma.done [#allocation9], 4096
    $region73: #{state_action_forward.1} parent=1 // pred_fallthru
      _
    // Predicated region
    $region74: #{state_action_forward.1} parent=1 // pred_check
      _
    $region75: #{state_action_forward.1} parent=1 // pred_check_branch
      %204 = sbr.rel (0) target = $region77
    $region76: #{state_action_forward.1} parent=1 // pred_region
      %206 = dma.done [#allocation9], 2048
    $region77: #{state_action_forward.1} parent=1 // pred_fallthru
      _
    // Predicated region
    $region78: #{state_action_forward.1} parent=1 // pred_check
      _
    $region79: #{state_action_forward.1} parent=1 // pred_check_branch
      %208 = sbr.rel (0) target = $region81
    $region80: #{state_action_forward.1} parent=1 // pred_region
      %210 = dma.done [#allocation12], 2048
    $region81: #{state_action_forward.1} parent=1 // pred_fallthru
      _
    // Predicated region
    $region82: #{state_action_forward.1} parent=1 // pred_check
      _
    $region83: #{state_action_forward.1} parent=1 // pred_check_branch
      %212 = sbr.rel (0) target = $region85
    $region84: #{state_action_forward.1} parent=1 // pred_region
      %214 = dma.done [#allocation12], 4096
    $region85: #{state_action_forward.1} parent=1 // pred_fallthru
      _
    // Predicated region
    $region86: #{state_action_forward.1} parent=1 // pred_check
      _
    $region87: #{state_action_forward.1} parent=1 // pred_check_branch
      %216 = sbr.rel (0) target = $region89
    $region88: #{state_action_forward.1} parent=1 // pred_region
      %218 = dma.done [#allocation15], 2048
    $region89: #{state_action_forward.1} parent=1 // pred_fallthru
      _
    // Predicated region
    $region90: #{state_action_forward.1} parent=1 // pred_check
      _
    $region91: #{state_action_forward.1} parent=1 // pred_check_branch
      %220 = sbr.rel (0) target = $region93
    $region92: #{state_action_forward.1} parent=1 // pred_region
      %222 = dma.done [#allocation15], 2048
    $region93: #{state_action_forward.1} parent=1 // pred_fallthru
      _
    // Predicated region
    $region94: #{state_action_forward.1} parent=1 // pred_check
      _
    $region95: #{state_action_forward.1} parent=1 // pred_check_branch
      %224 = sbr.rel (0) target = $region97
    $region96: #{state_action_forward.1} parent=1 // pred_region
      %226 = dma.done [#allocation18], 4096
    $region97: #{state_action_forward.1} parent=1 // pred_fallthru
      _
    // Predicated region
    $region98: #{state_action_forward.1} parent=1 // pred_check
      _
    $region99: #{state_action_forward.1} parent=1 // pred_check_branch
      %228 = sbr.rel (0) target = $region101
    $region100: #{state_action_forward.1} parent=1 // pred_region
      %230 = dma.done [#allocation18], 2048
    $region101: #{state_action_forward.1} parent=1 // pred_fallthru
      _
    // Predicated region
    $region102: #{state_action_forward.1} parent=1 // pred_check
      _
    $region103: #{state_action_forward.1} parent=1 // pred_check_branch
      %232 = sbr.rel (0) target = $region105
    $region104: #{state_action_forward.1} parent=1 // pred_region
      %234 = dma.done [#allocation21], 2048
    $region105: #{state_action_forward.1} parent=1 // pred_fallthru
      _
    %v235 = vld [vmem:[%s0] sm:$0xff]
    %v236 = vld [vmem:[%s13] ss:$0 sm:$0xff]
    %v237 = vld [vmem:[#allocation2] sm:$0xff]
    %v238 = vld [vmem:[#allocation2 + $0x8] sm:$0xff]
    %v239 = vld [vmem:[#allocation2 + $0x10] sm:$0xff]
    %v240 = vld [vmem:[#allocation2 + $0x18] sm:$0xff]
    %v241 = vld [vmem:[#allocation2 + $0x20] sm:$0xff]
    %v242 = vld [vmem:[#allocation2 + $0x28] sm:$0xff]
    %v243 = vld [vmem:[#allocation2 + $0x30] sm:$0xff]
    %v244 = vld [vmem:[#allocation2 + $0x38] sm:$0xff]
    %v245 = vld [vmem:[#allocation2 + $0x40] sm:$0xff]
    %v246 = vld [vmem:[#allocation2 + $0x48] sm:$0xff]
    %v247 = vld [vmem:[#allocation2 + $0x50] sm:$0xff]
    %v248 = vld [vmem:[#allocation2 + $0x58] sm:$0xff]
    %v249 = vld [vmem:[#allocation2 + $0x60] sm:$0xff]
    %v250 = vld [vmem:[#allocation2 + $0x68] sm:$0xff]
    %v251 = vld [vmem:[#allocation2 + $0x70] sm:$0xff]
    %v252 = vld [vmem:[#allocation2 + $0x78] sm:$0xff]
    %253 = vmatpush.msra.mxu0 %v252
    %254 = vmatpush.msra.mxu0 %v251
    %255 = vmatpush.msra.mxu0 %v250
    %256 = vmatpush.msra.mxu0 %v249
    %257 = vmatpush.msra.mxu0 %v248
    %258 = vmatpush.msra.mxu0 %v247
    %259 = vmatpush.msra.mxu0 %v246
    %260 = vmatpush.msra.mxu0 %v245
    %261 = vmatpush.msra.mxu0 %v244
    %262 = vmatpush.msra.mxu0 %v243
    %263 = vmatpush.msra.mxu0 %v242
    %264 = vmatpush.msra.mxu0 %v241
    %265 = vmatpush.msra.mxu0 %v240
    %266 = vmatpush.msra.mxu0 %v239
    %267 = vmatpush.msra.mxu0 %v238
    %268 = vmatpush.msra.mxu0 %v237
    %269 = vmatmul.f32.gmra.mxu0 %v235
    %v270 = vpop.f32.mrf.mxu0
    %v271 = vadd.f32 %v236, %v270
    %272 = vdwg.mxu0
    %v273 = vmax.f32 %v271, 0.0
    %v274 = vld [vmem:[%s13 + $0x1] ss:$0 sm:$0xff]
    %v275 = vld [vmem:[#allocation5] sm:$0xff]
    %v276 = vld [vmem:[#allocation5 + $0x8] sm:$0xff]
    %v277 = vld [vmem:[#allocation5 + $0x10] sm:$0xff]
    %v278 = vld [vmem:[#allocation5 + $0x18] sm:$0xff]
    %v279 = vld [vmem:[#allocation5 + $0x20] sm:$0xff]
    %v280 = vld [vmem:[#allocation5 + $0x28] sm:$0xff]
    %v281 = vld [vmem:[#allocation5 + $0x30] sm:$0xff]
    %v282 = vld [vmem:[#allocation5 + $0x38] sm:$0xff]
    %v283 = vld [vmem:[#allocation5 + $0x40] sm:$0xff]
    %v284 = vld [vmem:[#allocation5 + $0x48] sm:$0xff]
    %v285 = vld [vmem:[#allocation5 + $0x50] sm:$0xff]
    %v286 = vld [vmem:[#allocation5 + $0x58] sm:$0xff]
    %v287 = vld [vmem:[#allocation5 + $0x60] sm:$0xff]
    %v288 = vld [vmem:[#allocation5 + $0x68] sm:$0xff]
    %v289 = vld [vmem:[#allocation5 + $0x70] sm:$0xff]
    %v290 = vld [vmem:[#allocation5 + $0x78] sm:$0xff]
    %291 = vmatpush.msra.mxu0 %v290
    %292 = vmatpush.msra.mxu0 %v289
    %293 = vmatpush.msra.mxu0 %v288
    %294 = vmatpush.msra.mxu0 %v287
    %295 = vmatpush.msra.mxu0 %v286
    %296 = vmatpush.msra.mxu0 %v285
    %297 = vmatpush.msra.mxu0 %v284
    %298 = vmatpush.msra.mxu0 %v283
    %299 = vmatpush.msra.mxu0 %v282
    %300 = vmatpush.msra.mxu0 %v281
    %301 = vmatpush.msra.mxu0 %v280
    %302 = vmatpush.msra.mxu0 %v279
    %303 = vmatpush.msra.mxu0 %v278
    %304 = vmatpush.msra.mxu0 %v277
    %305 = vmatpush.msra.mxu0 %v276
    %306 = vmatpush.msra.mxu0 %v275
    %307 = vmatmul.f32.gmra.mxu0 %v273
    %v308 = vpop.f32.mrf.mxu0
    %v309 = vadd.f32 %v274, %v308
    %310 = vdwg.mxu0
    %v311 = vld [vmem:[%s13 + $0x2] ss:$0 sm:$0xff]
    %v312 = vld [vmem:[#allocation7] sm:$0xff]
    %v313 = vld [vmem:[#allocation7 + $0x8] sm:$0xff]
    %v314 = vld [vmem:[#allocation7 + $0x10] sm:$0xff]
    %v315 = vld [vmem:[#allocation7 + $0x18] sm:$0xff]
    %v316 = vld [vmem:[#allocation7 + $0x20] sm:$0xff]
    %v317 = vld [vmem:[#allocation7 + $0x28] sm:$0xff]
    %v318 = vld [vmem:[#allocation7 + $0x30] sm:$0xff]
    %v319 = vld [vmem:[#allocation7 + $0x38] sm:$0xff]
    %v320 = vld [vmem:[#allocation7 + $0x40] sm:$0xff]
    %v321 = vld [vmem:[#allocation7 + $0x48] sm:$0xff]
    %v322 = vld [vmem:[#allocation7 + $0x50] sm:$0xff]
    %v323 = vld [vmem:[#allocation7 + $0x58] sm:$0xff]
    %v324 = vld [vmem:[#allocation7 + $0x60] sm:$0xff]
    %v325 = vld [vmem:[#allocation7 + $0x68] sm:$0xff]
    %v326 = vld [vmem:[#allocation7 + $0x70] sm:$0xff]
    %v327 = vld [vmem:[#allocation7 + $0x78] sm:$0xff]
    %328 = vmatpush.msra.mxu0 %v327
    %329 = vmatpush.msra.mxu0 %v326
    %330 = vmatpush.msra.mxu0 %v325
    %331 = vmatpush.msra.mxu0 %v324
    %332 = vmatpush.msra.mxu0 %v323
    %333 = vmatpush.msra.mxu0 %v322
    %334 = vmatpush.msra.mxu0 %v321
    %335 = vmatpush.msra.mxu0 %v320
    %336 = vmatpush.msra.mxu0 %v319
    %337 = vmatpush.msra.mxu0 %v318
    %338 = vmatpush.msra.mxu0 %v317
    %339 = vmatpush.msra.mxu0 %v316
    %340 = vmatpush.msra.mxu0 %v315
    %341 = vmatpush.msra.mxu0 %v314
    %342 = vmatpush.msra.mxu0 %v313
    %343 = vmatpush.msra.mxu0 %v312
    %344 = vmatmul.f32.gmra.mxu0 %v309
    %v345 = vpop.f32.mrf.mxu0
    %v346 = vadd.f32 %v311, %v345
    %347 = vdwg.mxu0
    %v348 = vmax.f32 %v346, 0.0
    %s349 = scalar_lea.vmem %s13, 3
    %v350 = vld [vmem:[%s349] ss:$8 sm:$0x3]
    %v351 = vld [vmem:[#allocation8] sm:$0xff]
    %v352 = vld [vmem:[#allocation8 + $0x8] sm:$0xff]
    %v353 = vld [vmem:[#allocation8 + $0x10] sm:$0xff]
    %v354 = vld [vmem:[#allocation8 + $0x18] sm:$0xff]
    %v355 = vld [vmem:[#allocation8 + $0x20] sm:$0xff]
    %v356 = vld [vmem:[#allocation8 + $0x28] sm:$0xff]
    %v357 = vld [vmem:[#allocation8 + $0x30] sm:$0xff]
    %v358 = vld [vmem:[#allocation8 + $0x38] sm:$0xff]
    %v359 = vld [vmem:[#allocation8 + $0x40] sm:$0xff]
    %v360 = vld [vmem:[#allocation8 + $0x48] sm:$0xff]
    %v361 = vld [vmem:[#allocation8 + $0x50] sm:$0xff]
    %v362 = vld [vmem:[#allocation8 + $0x58] sm:$0xff]
    %v363 = vld [vmem:[#allocation8 + $0x60] sm:$0xff]
    %v364 = vld [vmem:[#allocation8 + $0x68] sm:$0xff]
    %v365 = vld [vmem:[#allocation8 + $0x70] sm:$0xff]
    %v366 = vld [vmem:[#allocation8 + $0x78] sm:$0xff]
    %v367 = vld [vmem:[#allocation8 + $0x80] sm:$0xff]
    %v368 = vld [vmem:[#allocation8 + $0x88] sm:$0xff]
    %v369 = vld [vmem:[#allocation8 + $0x90] sm:$0xff]
    %v370 = vld [vmem:[#allocation8 + $0x98] sm:$0xff]
    %v371 = vld [vmem:[#allocation8 + $0xa0] sm:$0xff]
    %v372 = vld [vmem:[#allocation8 + $0xa8] sm:$0xff]
    %v373 = vld [vmem:[#allocation8 + $0xb0] sm:$0xff]
    %v374 = vld [vmem:[#allocation8 + $0xb8] sm:$0xff]
    %v375 = vld [vmem:[#allocation8 + $0xc0] sm:$0xff]
    %v376 = vld [vmem:[#allocation8 + $0xc8] sm:$0xff]
    %v377 = vld [vmem:[#allocation8 + $0xd0] sm:$0xff]
    %v378 = vld [vmem:[#allocation8 + $0xd8] sm:$0xff]
    %v379 = vld [vmem:[#allocation8 + $0xe0] sm:$0xff]
    %v380 = vld [vmem:[#allocation8 + $0xe8] sm:$0xff]
    %v381 = vld [vmem:[#allocation8 + $0xf0] sm:$0xff]
    %v382 = vld [vmem:[#allocation8 + $0xf8] sm:$0xff]
    %v384 = vperm.slane %v350, 0
    %v385 = vperm.slane %v350, 1
    %388 = vmatpush.msra.mxu0 %v381
    %389 = vmatpush.msra.mxu0 %v379
    %390 = vmatpush.msra.mxu0 %v377
    %391 = vmatpush.msra.mxu0 %v375
    %392 = vmatpush.msra.mxu0 %v373
    %393 = vmatpush.msra.mxu0 %v371
    %394 = vmatpush.msra.mxu0 %v369
    %395 = vmatpush.msra.mxu0 %v367
    %396 = vmatpush.msra.mxu0 %v365
    %397 = vmatpush.msra.mxu0 %v363
    %398 = vmatpush.msra.mxu0 %v361
    %399 = vmatpush.msra.mxu0 %v359
    %400 = vmatpush.msra.mxu0 %v357
    %401 = vmatpush.msra.mxu0 %v355
    %402 = vmatpush.msra.mxu0 %v353
    %403 = vmatpush.msra.mxu0 %v351
    %404 = vmatmul.f32.gmra.mxu0 %v348
    %v405 = vpop.f32.mrf.mxu0
    %v406 = vadd.f32 %v384, %v405
    %407 = vdwg.mxu0
    %408 = vmatpush.msra.mxu0 %v382
    %409 = vmatpush.msra.mxu0 %v380
    %410 = vmatpush.msra.mxu0 %v378
    %411 = vmatpush.msra.mxu0 %v376
    %412 = vmatpush.msra.mxu0 %v374
    %413 = vmatpush.msra.mxu0 %v372
    %414 = vmatpush.msra.mxu0 %v370
    %415 = vmatpush.msra.mxu0 %v368
    %416 = vmatpush.msra.mxu0 %v366
    %417 = vmatpush.msra.mxu0 %v364
    %418 = vmatpush.msra.mxu0 %v362
    %419 = vmatpush.msra.mxu0 %v360
    %420 = vmatpush.msra.mxu0 %v358
    %421 = vmatpush.msra.mxu0 %v356
    %422 = vmatpush.msra.mxu0 %v354
    %423 = vmatpush.msra.mxu0 %v352
    %424 = vmatmul.f32.gmra.mxu0 %v348
    %v425 = vpop.f32.mrf.mxu0
    %v426 = vadd.f32 %v385, %v425
    %427 = vdwg.mxu0
    %v428 = vsub.f32 0.0, %v406
    %v429 = vmul.f32 %v428, 1.442695
    %v430 = vpow.pop %v429
    %v431 = vadd.f32 %v430, 1.0
    %v432 = vrcp.pop %v431
    %v433 = vmul.f32 %v431, %v432
    %v434 = vsub.f32 1.0, %v433
    %v435 = vmul.f32 %v432, %v434
    %v436 = vadd.f32 %v432, %v435
    %vm437 = vweird.f32 %v431
    %vm438 = vweird.f32 %v432
    %vm439 = vmor %vm437, %vm438
    %v440 = vsel %vm439, %v432, %v436
    %v441 = vand.u32 2147483647, %v431
    %vm442 = vcmp.eq.f32.partialorder %v441, 8.507059e+37
    %v443 = vand.u32 %v431, 2147483648
    %v444 = vor.u32 1.1754944e-38, %v443
    %v445 = vsel %vm442, %v444, %v440
    %v446 = vmul.f32 1.0, %v445
    %v447 = vmul.f32 %v273, %v446
    %v448 = vadd.f32 %v447, %v426
    %v449 = vadd.f32 %v448, %v273
    %v450 = vmax.f32 %v449, 0.0
    %v451 = vld [vmem:[%s13 + $0x4] ss:$0 sm:$0xff]
    %v452 = vld [vmem:[#allocation10] sm:$0xff]
    %v453 = vld [vmem:[#allocation10 + $0x8] sm:$0xff]
    %v454 = vld [vmem:[#allocation10 + $0x10] sm:$0xff]
    %v455 = vld [vmem:[#allocation10 + $0x18] sm:$0xff]
    %v456 = vld [vmem:[#allocation10 + $0x20] sm:$0xff]
    %v457 = vld [vmem:[#allocation10 + $0x28] sm:$0xff]
    %v458 = vld [vmem:[#allocation10 + $0x30] sm:$0xff]
    %v459 = vld [vmem:[#allocation10 + $0x38] sm:$0xff]
    %v460 = vld [vmem:[#allocation10 + $0x40] sm:$0xff]
    %v461 = vld [vmem:[#allocation10 + $0x48] sm:$0xff]
    %v462 = vld [vmem:[#allocation10 + $0x50] sm:$0xff]
    %v463 = vld [vmem:[#allocation10 + $0x58] sm:$0xff]
    %v464 = vld [vmem:[#allocation10 + $0x60] sm:$0xff]
    %v465 = vld [vmem:[#allocation10 + $0x68] sm:$0xff]
    %v466 = vld [vmem:[#allocation10 + $0x70] sm:$0xff]
    %v467 = vld [vmem:[#allocation10 + $0x78] sm:$0xff]
    %468 = vmatpush.msra.mxu0 %v467
    %469 = vmatpush.msra.mxu0 %v466
    %470 = vmatpush.msra.mxu0 %v465
    %471 = vmatpush.msra.mxu0 %v464
    %472 = vmatpush.msra.mxu0 %v463
    %473 = vmatpush.msra.mxu0 %v462
    %474 = vmatpush.msra.mxu0 %v461
    %475 = vmatpush.msra.mxu0 %v460
    %476 = vmatpush.msra.mxu0 %v459
    %477 = vmatpush.msra.mxu0 %v458
    %478 = vmatpush.msra.mxu0 %v457
    %479 = vmatpush.msra.mxu0 %v456
    %480 = vmatpush.msra.mxu0 %v455
    %481 = vmatpush.msra.mxu0 %v454
    %482 = vmatpush.msra.mxu0 %v453
    %483 = vmatpush.msra.mxu0 %v452
    %484 = vmatmul.f32.gmra.mxu0 %v450
    %v485 = vpop.f32.mrf.mxu0
    %v486 = vadd.f32 %v451, %v485
    %487 = vdwg.mxu0
    %v488 = vld [vmem:[%s13 + $0x5] ss:$0 sm:$0xff]
    %v489 = vld [vmem:[#allocation11] sm:$0xff]
    %v490 = vld [vmem:[#allocation11 + $0x8] sm:$0xff]
    %v491 = vld [vmem:[#allocation11 + $0x10] sm:$0xff]
    %v492 = vld [vmem:[#allocation11 + $0x18] sm:$0xff]
    %v493 = vld [vmem:[#allocation11 + $0x20] sm:$0xff]
    %v494 = vld [vmem:[#allocation11 + $0x28] sm:$0xff]
    %v495 = vld [vmem:[#allocation11 + $0x30] sm:$0xff]
    %v496 = vld [vmem:[#allocation11 + $0x38] sm:$0xff]
    %v497 = vld [vmem:[#allocation11 + $0x40] sm:$0xff]
    %v498 = vld [vmem:[#allocation11 + $0x48] sm:$0xff]
    %v499 = vld [vmem:[#allocation11 + $0x50] sm:$0xff]
    %v500 = vld [vmem:[#allocation11 + $0x58] sm:$0xff]
    %v501 = vld [vmem:[#allocation11 + $0x60] sm:$0xff]
    %v502 = vld [vmem:[#allocation11 + $0x68] sm:$0xff]
    %v503 = vld [vmem:[#allocation11 + $0x70] sm:$0xff]
    %v504 = vld [vmem:[#allocation11 + $0x78] sm:$0xff]
    %505 = vmatpush.msra.mxu0 %v504
    %506 = vmatpush.msra.mxu0 %v503
    %507 = vmatpush.msra.mxu0 %v502
    %508 = vmatpush.msra.mxu0 %v501
    %509 = vmatpush.msra.mxu0 %v500
    %510 = vmatpush.msra.mxu0 %v499
    %511 = vmatpush.msra.mxu0 %v498
    %512 = vmatpush.msra.mxu0 %v497
    %513 = vmatpush.msra.mxu0 %v496
    %514 = vmatpush.msra.mxu0 %v495
    %515 = vmatpush.msra.mxu0 %v494
    %516 = vmatpush.msra.mxu0 %v493
    %517 = vmatpush.msra.mxu0 %v492
    %518 = vmatpush.msra.mxu0 %v491
    %519 = vmatpush.msra.mxu0 %v490
    %520 = vmatpush.msra.mxu0 %v489
    %521 = vmatmul.f32.gmra.mxu0 %v486
    %v522 = vpop.f32.mrf.mxu0
    %v523 = vadd.f32 %v488, %v522
    %524 = vdwg.mxu0
    %v525 = vmax.f32 %v523, 0.0
    %s526 = scalar_lea.vmem %s13, 6
    %v527 = vld [vmem:[%s526] ss:$8 sm:$0x3]
    %v528 = vld [vmem:[#allocation13] sm:$0xff]
    %v529 = vld [vmem:[#allocation13 + $0x8] sm:$0xff]
    %v530 = vld [vmem:[#allocation13 + $0x10] sm:$0xff]
    %v531 = vld [vmem:[#allocation13 + $0x18] sm:$0xff]
    %v532 = vld [vmem:[#allocation13 + $0x20] sm:$0xff]
    %v533 = vld [vmem:[#allocation13 + $0x28] sm:$0xff]
    %v534 = vld [vmem:[#allocation13 + $0x30] sm:$0xff]
    %v535 = vld [vmem:[#allocation13 + $0x38] sm:$0xff]
    %v536 = vld [vmem:[#allocation13 + $0x40] sm:$0xff]
    %v537 = vld [vmem:[#allocation13 + $0x48] sm:$0xff]
    %v538 = vld [vmem:[#allocation13 + $0x50] sm:$0xff]
    %v539 = vld [vmem:[#allocation13 + $0x58] sm:$0xff]
    %v540 = vld [vmem:[#allocation13 + $0x60] sm:$0xff]
    %v541 = vld [vmem:[#allocation13 + $0x68] sm:$0xff]
    %v542 = vld [vmem:[#allocation13 + $0x70] sm:$0xff]
    %v543 = vld [vmem:[#allocation13 + $0x78] sm:$0xff]
    %v544 = vld [vmem:[#allocation13 + $0x80] sm:$0xff]
    %v545 = vld [vmem:[#allocation13 + $0x88] sm:$0xff]
    %v546 = vld [vmem:[#allocation13 + $0x90] sm:$0xff]
    %v547 = vld [vmem:[#allocation13 + $0x98] sm:$0xff]
    %v548 = vld [vmem:[#allocation13 + $0xa0] sm:$0xff]
    %v549 = vld [vmem:[#allocation13 + $0xa8] sm:$0xff]
    %v550 = vld [vmem:[#allocation13 + $0xb0] sm:$0xff]
    %v551 = vld [vmem:[#allocation13 + $0xb8] sm:$0xff]
    %v552 = vld [vmem:[#allocation13 + $0xc0] sm:$0xff]
    %v553 = vld [vmem:[#allocation13 + $0xc8] sm:$0xff]
    %v554 = vld [vmem:[#allocation13 + $0xd0] sm:$0xff]
    %v555 = vld [vmem:[#allocation13 + $0xd8] sm:$0xff]
    %v556 = vld [vmem:[#allocation13 + $0xe0] sm:$0xff]
    %v557 = vld [vmem:[#allocation13 + $0xe8] sm:$0xff]
    %v558 = vld [vmem:[#allocation13 + $0xf0] sm:$0xff]
    %v559 = vld [vmem:[#allocation13 + $0xf8] sm:$0xff]
    %v561 = vperm.slane %v527, 0
    %v562 = vperm.slane %v527, 1
    %565 = vmatpush.msra.mxu0 %v558
    %566 = vmatpush.msra.mxu0 %v556
    %567 = vmatpush.msra.mxu0 %v554
    %568 = vmatpush.msra.mxu0 %v552
    %569 = vmatpush.msra.mxu0 %v550
    %570 = vmatpush.msra.mxu0 %v548
    %571 = vmatpush.msra.mxu0 %v546
    %572 = vmatpush.msra.mxu0 %v544
    %573 = vmatpush.msra.mxu0 %v542
    %574 = vmatpush.msra.mxu0 %v540
    %575 = vmatpush.msra.mxu0 %v538
    %576 = vmatpush.msra.mxu0 %v536
    %577 = vmatpush.msra.mxu0 %v534
    %578 = vmatpush.msra.mxu0 %v532
    %579 = vmatpush.msra.mxu0 %v530
    %580 = vmatpush.msra.mxu0 %v528
    %581 = vmatmul.f32.gmra.mxu0 %v525
    %v582 = vpop.f32.mrf.mxu0
    %v583 = vadd.f32 %v561, %v582
    %584 = vdwg.mxu0
    %585 = vmatpush.msra.mxu0 %v559
    %586 = vmatpush.msra.mxu0 %v557
    %587 = vmatpush.msra.mxu0 %v555
    %588 = vmatpush.msra.mxu0 %v553
    %589 = vmatpush.msra.mxu0 %v551
    %590 = vmatpush.msra.mxu0 %v549
    %591 = vmatpush.msra.mxu0 %v547
    %592 = vmatpush.msra.mxu0 %v545
    %593 = vmatpush.msra.mxu0 %v543
    %594 = vmatpush.msra.mxu0 %v541
    %595 = vmatpush.msra.mxu0 %v539
    %596 = vmatpush.msra.mxu0 %v537
    %597 = vmatpush.msra.mxu0 %v535
    %598 = vmatpush.msra.mxu0 %v533
    %599 = vmatpush.msra.mxu0 %v531
    %600 = vmatpush.msra.mxu0 %v529
    %601 = vmatmul.f32.gmra.mxu0 %v525
    %v602 = vpop.f32.mrf.mxu0
    %v603 = vadd.f32 %v562, %v602
    %604 = vdwg.mxu0
    %v605 = vsub.f32 0.0, %v583
    %v606 = vmul.f32 %v605, 1.442695
    %v607 = vpow.pop %v606
    %v608 = vadd.f32 %v607, 1.0
    %v609 = vrcp.pop %v608
    %v610 = vmul.f32 %v608, %v609
    %v611 = vsub.f32 1.0, %v610
    %v612 = vmul.f32 %v609, %v611
    %v613 = vadd.f32 %v609, %v612
    %vm614 = vweird.f32 %v608
    %vm615 = vweird.f32 %v609
    %vm616 = vmor %vm614, %vm615
    %v617 = vsel %vm616, %v609, %v613
    %v618 = vand.u32 2147483647, %v608
    %vm619 = vcmp.eq.f32.partialorder %v618, 8.507059e+37
    %v620 = vand.u32 %v608, 2147483648
    %v621 = vor.u32 1.1754944e-38, %v620
    %v622 = vsel %vm619, %v621, %v617
    %v623 = vmul.f32 1.0, %v622
    %v624 = vmul.f32 %v450, %v623
    %v625 = vadd.f32 %v624, %v603
    %v626 = vadd.f32 %v625, %v450
    %v627 = vmax.f32 %v626, 0.0
    %v628 = vld [vmem:[%s13 + $0x7] ss:$0 sm:$0xff]
    %v629 = vld [vmem:[#allocation14] sm:$0xff]
    %v630 = vld [vmem:[#allocation14 + $0x8] sm:$0xff]
    %v631 = vld [vmem:[#allocation14 + $0x10] sm:$0xff]
    %v632 = vld [vmem:[#allocation14 + $0x18] sm:$0xff]
    %v633 = vld [vmem:[#allocation14 + $0x20] sm:$0xff]
    %v634 = vld [vmem:[#allocation14 + $0x28] sm:$0xff]
    %v635 = vld [vmem:[#allocation14 + $0x30] sm:$0xff]
    %v636 = vld [vmem:[#allocation14 + $0x38] sm:$0xff]
    %v637 = vld [vmem:[#allocation14 + $0x40] sm:$0xff]
    %v638 = vld [vmem:[#allocation14 + $0x48] sm:$0xff]
    %v639 = vld [vmem:[#allocation14 + $0x50] sm:$0xff]
    %v640 = vld [vmem:[#allocation14 + $0x58] sm:$0xff]
    %v641 = vld [vmem:[#allocation14 + $0x60] sm:$0xff]
    %v642 = vld [vmem:[#allocation14 + $0x68] sm:$0xff]
    %v643 = vld [vmem:[#allocation14 + $0x70] sm:$0xff]
    %v644 = vld [vmem:[#allocation14 + $0x78] sm:$0xff]
    %645 = vmatpush.msra.mxu0 %v644
    %646 = vmatpush.msra.mxu0 %v643
    %647 = vmatpush.msra.mxu0 %v642
    %648 = vmatpush.msra.mxu0 %v641
    %649 = vmatpush.msra.mxu0 %v640
    %650 = vmatpush.msra.mxu0 %v639
    %651 = vmatpush.msra.mxu0 %v638
    %652 = vmatpush.msra.mxu0 %v637
    %653 = vmatpush.msra.mxu0 %v636
    %654 = vmatpush.msra.mxu0 %v635
    %655 = vmatpush.msra.mxu0 %v634
    %656 = vmatpush.msra.mxu0 %v633
    %657 = vmatpush.msra.mxu0 %v632
    %658 = vmatpush.msra.mxu0 %v631
    %659 = vmatpush.msra.mxu0 %v630
    %660 = vmatpush.msra.mxu0 %v629
    %661 = vmatmul.f32.gmra.mxu0 %v627
    %v662 = vpop.f32.mrf.mxu0
    %v663 = vadd.f32 %v628, %v662
    %664 = vdwg.mxu0
    %v665 = vld [vmem:[%s13 + $0x10] ss:$0 sm:$0xff]
    %v666 = vld [vmem:[#allocation16] sm:$0xff]
    %v667 = vld [vmem:[#allocation16 + $0x8] sm:$0xff]
    %v668 = vld [vmem:[#allocation16 + $0x10] sm:$0xff]
    %v669 = vld [vmem:[#allocation16 + $0x18] sm:$0xff]
    %v670 = vld [vmem:[#allocation16 + $0x20] sm:$0xff]
    %v671 = vld [vmem:[#allocation16 + $0x28] sm:$0xff]
    %v672 = vld [vmem:[#allocation16 + $0x30] sm:$0xff]
    %v673 = vld [vmem:[#allocation16 + $0x38] sm:$0xff]
    %v674 = vld [vmem:[#allocation16 + $0x40] sm:$0xff]
    %v675 = vld [vmem:[#allocation16 + $0x48] sm:$0xff]
    %v676 = vld [vmem:[#allocation16 + $0x50] sm:$0xff]
    %v677 = vld [vmem:[#allocation16 + $0x58] sm:$0xff]
    %v678 = vld [vmem:[#allocation16 + $0x60] sm:$0xff]
    %v679 = vld [vmem:[#allocation16 + $0x68] sm:$0xff]
    %v680 = vld [vmem:[#allocation16 + $0x70] sm:$0xff]
    %v681 = vld [vmem:[#allocation16 + $0x78] sm:$0xff]
    %682 = vmatpush.msra.mxu0 %v681
    %683 = vmatpush.msra.mxu0 %v680
    %684 = vmatpush.msra.mxu0 %v679
    %685 = vmatpush.msra.mxu0 %v678
    %686 = vmatpush.msra.mxu0 %v677
    %687 = vmatpush.msra.mxu0 %v676
    %688 = vmatpush.msra.mxu0 %v675
    %689 = vmatpush.msra.mxu0 %v674
    %690 = vmatpush.msra.mxu0 %v673
    %691 = vmatpush.msra.mxu0 %v672
    %692 = vmatpush.msra.mxu0 %v671
    %693 = vmatpush.msra.mxu0 %v670
    %694 = vmatpush.msra.mxu0 %v669
    %695 = vmatpush.msra.mxu0 %v668
    %696 = vmatpush.msra.mxu0 %v667
    %697 = vmatpush.msra.mxu0 %v666
    %698 = vmatmul.f32.gmra.mxu0 %v663
    %v699 = vpop.f32.mrf.mxu0
    %v700 = vadd.f32 %v665, %v699
    %701 = vdwg.mxu0
    %v702 = vmax.f32 %v700, 0.0
    %s703 = scalar_lea.vmem %s13, 17
    %v704 = vld [vmem:[%s703] ss:$8 sm:$0x3]
    %v705 = vld [vmem:[#allocation17] sm:$0xff]
    %v706 = vld [vmem:[#allocation17 + $0x8] sm:$0xff]
    %v707 = vld [vmem:[#allocation17 + $0x10] sm:$0xff]
    %v708 = vld [vmem:[#allocation17 + $0x18] sm:$0xff]
    %v709 = vld [vmem:[#allocation17 + $0x20] sm:$0xff]
    %v710 = vld [vmem:[#allocation17 + $0x28] sm:$0xff]
    %v711 = vld [vmem:[#allocation17 + $0x30] sm:$0xff]
    %v712 = vld [vmem:[#allocation17 + $0x38] sm:$0xff]
    %v713 = vld [vmem:[#allocation17 + $0x40] sm:$0xff]
    %v714 = vld [vmem:[#allocation17 + $0x48] sm:$0xff]
    %v715 = vld [vmem:[#allocation17 + $0x50] sm:$0xff]
    %v716 = vld [vmem:[#allocation17 + $0x58] sm:$0xff]
    %v717 = vld [vmem:[#allocation17 + $0x60] sm:$0xff]
    %v718 = vld [vmem:[#allocation17 + $0x68] sm:$0xff]
    %v719 = vld [vmem:[#allocation17 + $0x70] sm:$0xff]
    %v720 = vld [vmem:[#allocation17 + $0x78] sm:$0xff]
    %v721 = vld [vmem:[#allocation17 + $0x80] sm:$0xff]
    %v722 = vld [vmem:[#allocation17 + $0x88] sm:$0xff]
    %v723 = vld [vmem:[#allocation17 + $0x90] sm:$0xff]
    %v724 = vld [vmem:[#allocation17 + $0x98] sm:$0xff]
    %v725 = vld [vmem:[#allocation17 + $0xa0] sm:$0xff]
    %v726 = vld [vmem:[#allocation17 + $0xa8] sm:$0xff]
    %v727 = vld [vmem:[#allocation17 + $0xb0] sm:$0xff]
    %v728 = vld [vmem:[#allocation17 + $0xb8] sm:$0xff]
    %v729 = vld [vmem:[#allocation17 + $0xc0] sm:$0xff]
    %v730 = vld [vmem:[#allocation17 + $0xc8] sm:$0xff]
    %v731 = vld [vmem:[#allocation17 + $0xd0] sm:$0xff]
    %v732 = vld [vmem:[#allocation17 + $0xd8] sm:$0xff]
    %v733 = vld [vmem:[#allocation17 + $0xe0] sm:$0xff]
    %v734 = vld [vmem:[#allocation17 + $0xe8] sm:$0xff]
    %v735 = vld [vmem:[#allocation17 + $0xf0] sm:$0xff]
    %v736 = vld [vmem:[#allocation17 + $0xf8] sm:$0xff]
    %v738 = vperm.slane %v704, 0
    %v739 = vperm.slane %v704, 1
    %742 = vmatpush.msra.mxu0 %v735
    %743 = vmatpush.msra.mxu0 %v733
    %744 = vmatpush.msra.mxu0 %v731
    %745 = vmatpush.msra.mxu0 %v729
    %746 = vmatpush.msra.mxu0 %v727
    %747 = vmatpush.msra.mxu0 %v725
    %748 = vmatpush.msra.mxu0 %v723
    %749 = vmatpush.msra.mxu0 %v721
    %750 = vmatpush.msra.mxu0 %v719
    %751 = vmatpush.msra.mxu0 %v717
    %752 = vmatpush.msra.mxu0 %v715
    %753 = vmatpush.msra.mxu0 %v713
    %754 = vmatpush.msra.mxu0 %v711
    %755 = vmatpush.msra.mxu0 %v709
    %756 = vmatpush.msra.mxu0 %v707
    %757 = vmatpush.msra.mxu0 %v705
    %758 = vmatmul.f32.gmra.mxu0 %v702
    %v759 = vpop.f32.mrf.mxu0
    %v760 = vadd.f32 %v738, %v759
    %761 = vdwg.mxu0
    %762 = vmatpush.msra.mxu0 %v736
    %763 = vmatpush.msra.mxu0 %v734
    %764 = vmatpush.msra.mxu0 %v732
    %765 = vmatpush.msra.mxu0 %v730
    %766 = vmatpush.msra.mxu0 %v728
    %767 = vmatpush.msra.mxu0 %v726
    %768 = vmatpush.msra.mxu0 %v724
    %769 = vmatpush.msra.mxu0 %v722
    %770 = vmatpush.msra.mxu0 %v720
    %771 = vmatpush.msra.mxu0 %v718
    %772 = vmatpush.msra.mxu0 %v716
    %773 = vmatpush.msra.mxu0 %v714
    %774 = vmatpush.msra.mxu0 %v712
    %775 = vmatpush.msra.mxu0 %v710
    %776 = vmatpush.msra.mxu0 %v708
    %777 = vmatpush.msra.mxu0 %v706
    %778 = vmatmul.f32.gmra.mxu0 %v702
    %v779 = vpop.f32.mrf.mxu0
    %v780 = vadd.f32 %v739, %v779
    %781 = vdwg.mxu0
    %v782 = vsub.f32 0.0, %v760
    %v783 = vmul.f32 %v782, 1.442695
    %v784 = vpow.pop %v783
    %v785 = vadd.f32 %v784, 1.0
    %v786 = vrcp.pop %v785
    %v787 = vmul.f32 %v785, %v786
    %v788 = vsub.f32 1.0, %v787
    %v789 = vmul.f32 %v786, %v788
    %v790 = vadd.f32 %v786, %v789
    %vm791 = vweird.f32 %v785
    %vm792 = vweird.f32 %v786
    %vm793 = vmor %vm791, %vm792
    %v794 = vsel %vm793, %v786, %v790
    %v795 = vand.u32 2147483647, %v785
    %vm796 = vcmp.eq.f32.partialorder %v795, 8.507059e+37
    %v797 = vand.u32 %v785, 2147483648
    %v798 = vor.u32 1.1754944e-38, %v797
    %v799 = vsel %vm796, %v798, %v794
    %v800 = vmul.f32 1.0, %v799
    %v801 = vmul.f32 %v627, %v800
    %v802 = vadd.f32 %v801, %v780
    %v803 = vadd.f32 %v802, %v627
    %v804 = vmax.f32 %v803, 0.0
    %v805 = vld [vmem:[%s13 + $0x12] ss:$0 sm:$0xff]
    %v806 = vld [vmem:[#allocation19] sm:$0xff]
    %v807 = vld [vmem:[#allocation19 + $0x8] sm:$0xff]
    %v808 = vld [vmem:[#allocation19 + $0x10] sm:$0xff]
    %v809 = vld [vmem:[#allocation19 + $0x18] sm:$0xff]
    %v810 = vld [vmem:[#allocation19 + $0x20] sm:$0xff]
    %v811 = vld [vmem:[#allocation19 + $0x28] sm:$0xff]
    %v812 = vld [vmem:[#allocation19 + $0x30] sm:$0xff]
    %v813 = vld [vmem:[#allocation19 + $0x38] sm:$0xff]
    %v814 = vld [vmem:[#allocation19 + $0x40] sm:$0xff]
    %v815 = vld [vmem:[#allocation19 + $0x48] sm:$0xff]
    %v816 = vld [vmem:[#allocation19 + $0x50] sm:$0xff]
    %v817 = vld [vmem:[#allocation19 + $0x58] sm:$0xff]
    %v818 = vld [vmem:[#allocation19 + $0x60] sm:$0xff]
    %v819 = vld [vmem:[#allocation19 + $0x68] sm:$0xff]
    %v820 = vld [vmem:[#allocation19 + $0x70] sm:$0xff]
    %v821 = vld [vmem:[#allocation19 + $0x78] sm:$0xff]
    %822 = vmatpush.msra.mxu0 %v821
    %823 = vmatpush.msra.mxu0 %v820
    %824 = vmatpush.msra.mxu0 %v819
    %825 = vmatpush.msra.mxu0 %v818
    %826 = vmatpush.msra.mxu0 %v817
    %827 = vmatpush.msra.mxu0 %v816
    %828 = vmatpush.msra.mxu0 %v815
    %829 = vmatpush.msra.mxu0 %v814
    %830 = vmatpush.msra.mxu0 %v813
    %831 = vmatpush.msra.mxu0 %v812
    %832 = vmatpush.msra.mxu0 %v811
    %833 = vmatpush.msra.mxu0 %v810
    %834 = vmatpush.msra.mxu0 %v809
    %835 = vmatpush.msra.mxu0 %v808
    %836 = vmatpush.msra.mxu0 %v807
    %837 = vmatpush.msra.mxu0 %v806
    %838 = vmatmul.f32.gmra.mxu0 %v804
    %v839 = vpop.f32.mrf.mxu0
    %v840 = vadd.f32 %v805, %v839
    %841 = vdwg.mxu0
    %v842 = vmax.f32 %v840, 0.0
    %v843 = vld [vmem:[%s13 + $0x13] ss:$0 sm:$0xff]
    %v844 = vld [vmem:[#allocation20] sm:$0xff]
    %v845 = vld [vmem:[#allocation20 + $0x8] sm:$0xff]
    %v846 = vld [vmem:[#allocation20 + $0x10] sm:$0xff]
    %v847 = vld [vmem:[#allocation20 + $0x18] sm:$0xff]
    %v848 = vld [vmem:[#allocation20 + $0x20] sm:$0xff]
    %v849 = vld [vmem:[#allocation20 + $0x28] sm:$0xff]
    %v850 = vld [vmem:[#allocation20 + $0x30] sm:$0xff]
    %v851 = vld [vmem:[#allocation20 + $0x38] sm:$0xff]
    %v852 = vld [vmem:[#allocation20 + $0x40] sm:$0xff]
    %v853 = vld [vmem:[#allocation20 + $0x48] sm:$0xff]
    %v854 = vld [vmem:[#allocation20 + $0x50] sm:$0xff]
    %v855 = vld [vmem:[#allocation20 + $0x58] sm:$0xff]
    %v856 = vld [vmem:[#allocation20 + $0x60] sm:$0xff]
    %v857 = vld [vmem:[#allocation20 + $0x68] sm:$0xff]
    %v858 = vld [vmem:[#allocation20 + $0x70] sm:$0xff]
    %v859 = vld [vmem:[#allocation20 + $0x78] sm:$0xff]
    %860 = vmatpush.msra.mxu0 %v859
    %861 = vmatpush.msra.mxu0 %v858
    %862 = vmatpush.msra.mxu0 %v857
    %863 = vmatpush.msra.mxu0 %v856
    %864 = vmatpush.msra.mxu0 %v855
    %865 = vmatpush.msra.mxu0 %v854
    %866 = vmatpush.msra.mxu0 %v853
    %867 = vmatpush.msra.mxu0 %v852
    %868 = vmatpush.msra.mxu0 %v851
    %869 = vmatpush.msra.mxu0 %v850
    %870 = vmatpush.msra.mxu0 %v849
    %871 = vmatpush.msra.mxu0 %v848
    %872 = vmatpush.msra.mxu0 %v847
    %873 = vmatpush.msra.mxu0 %v846
    %874 = vmatpush.msra.mxu0 %v845
    %875 = vmatpush.msra.mxu0 %v844
    %876 = vmatmul.f32.gmra.mxu0 %v842
    %v877 = vpop.f32.mrf.mxu0
    %v878 = vadd.f32 %v843, %v877
    %879 = vdwg.mxu0
    %880 = vadd.xlane.f32.xlu0 %v878
    %v881 = vpop.xlane.xlu0 %880
    %v882 = vmul.f32 %v881, 0.1
    %v883 = vld [vmem:[%s13 + $0x14] ss:$0 sm:$0xff]
    %v884 = vld [vmem:[%s13 + $0x15] ss:$0 sm:$0xff]
    %v885 = vmul.f32 %v842, %v883
    %886 = vadd.xlane.f32.xlu0 %v885
    %v887 = vpop.xlane.xlu0 %886
    %v888 = vadd.f32 %v887, %v884
    %v889 = vsub.f32 %v878, %v882
    %891 = vset.pattern.permute.xlu0 0
    %892 = vperm.xlu0 %891, %v888
    %v893 = vpop.permute.xlu0 %892
    %v895 = vadd.f32 %v889, %v893
    %896 = vst [vmem:[#allocation22] sm:$0xff] %v895
    // Predicated region
    $region106: #{state_action_forward.1} parent=1 // pred_check
      _
    $region107: #{state_action_forward.1} parent=1 // pred_check_branch
      %898 = sbr.rel (0) target = $region109
    $region108: #{state_action_forward.1} parent=1 // pred_region
      %900 = vsyncadd [#allocation4], 0
      %s902 = sshll.u32 [#allocation22], 4
      %s903 = int_to_ptr.vmem [resolvable:$true] %s902
      %s904 = sshll.u32 %s14, 4
      %s905 = int_to_ptr.hbm [resolvable:$true] %s904
      %907 = dma.vmem_to_hbm [thread:$0]  %s903, 128, %s905, [#allocation4]
    $region109: #{state_action_forward.1} parent=1 // pred_fallthru
      _
    // Predicated region
    $region110: #{state_action_forward.1} parent=1 // pred_check
      _
    $region111: #{state_action_forward.1} parent=1 // pred_check_branch
      %909 = sbr.rel (0) target = $region113
    $region112: #{state_action_forward.1} parent=1 // pred_region
      %911 = dma.done [#allocation4], 128
    $region113: #{state_action_forward.1} parent=1 // pred_fallthru
      _
    %912 = vsyncpa [#allocation3], 1
    %913 = vsyncpa [#allocation6], 1
    %914 = vsyncpa [#allocation9], 1
    %915 = vsyncpa [#allocation12], 1
    %916 = vsyncpa [#allocation15], 1
    %917 = vsyncpa [#allocation18], 1
    %918 = vsyncpa [#allocation21], 1
    %919 = vsyncpa [#allocation4], 1

</llo_original>
